<compile_context>
chip_gen: v5e
topology: v5e:2x2
jax: 0.10.0
libtpu: 0.0.40
codegen_flags: <defaults>
</compile_context>

<pallas_src>
import jax
import jax.numpy as jnp
import numpy as np
from jax.experimental import pallas as pl
from jax.experimental.pallas import tpu as pltpu

# ----- model hyperparameters (small, consistent with the module) -----
NUM_USERS = 64
NUM_ITEMS = 48
NUM_FACTORS = 128        # num_factors (TPU-friendly stand-in for 220)
NUM_LAYERS = 3           # num_layers
BATCH = 64
TILE_B = 16              # batch tile (>= 16 rows keeps bf16 sublane packing happy)


def neumf_kernel(ug_ref, ig_ref, x_ref,
                 w0_ref, b0_ref,
                 w1_ref, b1_ref,
                 w2_ref, b2_ref,
                 wfg_ref, wfm_ref, bf_ref,
                 out_ref):
    # GMF branch: elementwise product of user/item GMF embeddings (f32, VPU).
    gmf = ug_ref[...] * ig_ref[...]                                  # (tb, F) f32

    # MLP branch (bf16 operands, f32 accumulation on the MXU).
    h = jnp.dot(x_ref[...], w0_ref[...],
                preferred_element_type=jnp.float32) + b0_ref[...]    # (tb, 4F)
    h = jnp.maximum(h, 0.0)

    h = jnp.dot(h.astype(jnp.bfloat16), w1_ref[...],
                preferred_element_type=jnp.float32) + b1_ref[...]    # (tb, 2F)
    h = jnp.maximum(h, 0.0)

    h = jnp.dot(h.astype(jnp.bfloat16), w2_ref[...],
                preferred_element_type=jnp.float32) + b2_ref[...]    # (tb, F)
    h = jnp.maximum(h, 0.0)

    # Final Linear on concat([gmf, mlp]) with out_features=1, expressed as a
    # VPU multiply + lane reduction instead of an N=1 MXU matmul.
    out = jnp.sum(gmf * wfg_ref[...] + h * wfm_ref[...],
                  axis=-1, keepdims=True) + bf_ref[...]              # (tb, 1)
    out_ref[...] = out


def neumf_forward(p, user_idx, item_idx):
    """p: preprocessed params from prepare_params()."""
    F = NUM_FACTORS
    B = user_idx.shape[0]

    # Embedding gathers (glue, plain JAX). MLP halves pre-concatenated -> (B, 8F) bf16.
    ug = jnp.take(p["user_gmf"], user_idx, axis=0)                   # (B, F)  f32
    ig = jnp.take(p["item_gmf"], item_idx, axis=0)                   # (B, F)  f32
    mlp_in = jnp.concatenate(
        [jnp.take(p["user_mlp"], user_idx, axis=0),
         jnp.take(p["item_mlp"], item_idx, axis=0)], axis=-1)        # (B, 8F) bf16

    tb = min(TILE_B, B)
    assert B % tb == 0, "batch must be a multiple of the batch tile"
    grid = (B // tb,)

    def act_spec(cols):
        return pl.BlockSpec((tb, cols), lambda i: (i, 0))

    def const_spec(arr):
        # Same block for every grid step -> DMA'd once, stays VMEM-resident.
        return pl.BlockSpec(arr.shape, lambda i: (0, 0))

    out = pl.pallas_call(
        neumf_kernel,
        out_shape=jax.ShapeDtypeStruct((B, 1), jnp.float32),
        grid=grid,
        in_specs=[
            act_spec(F), act_spec(F), act_spec(8 * F),
            const_spec(p["w0"]), const_spec(p["b0"]),
            const_spec(p["w1"]), const_spec(p["b1"]),
            const_spec(p["w2"]), const_spec(p["b2"]),
            const_spec(p["wf_gmf"]), const_spec(p["wf_mlp"]),
            const_spec(p["bf"]),
        ],
        out_specs=pl.BlockSpec((tb, 1), lambda i: (i, 0)),
        compiler_params=pltpu.CompilerParams(
            dimension_semantics=("parallel",)),
    )(ug, ig, mlp_in,
      p["w0"], p["b0"], p["w1"], p["b1"], p["w2"], p["b2"],
      p["wf_gmf"], p["wf_mlp"], p["bf"])

    return out[:, 0]                                                 # matches rating.squeeze()


def init_params(key):
    """Raw parameters in torch layout: Linear weights are (out, in)."""
    F = NUM_FACTORS
    L = NUM_LAYERS
    ks = jax.random.split(key, 12)

    def kaiming(k, out_dim, in_dim):
        # nn.init.kaiming_normal_ default: fan_in, gain=sqrt(2)
        std = np.sqrt(2.0 / in_dim)
        return jax.random.normal(k, (out_dim, in_dim), jnp.float32) * std

    def bias(k, out_dim, in_dim):
        # torch Linear default bias init: U(-1/sqrt(fan_in), 1/sqrt(fan_in))
        bound = 1.0 / np.sqrt(in_dim)
        return jax.random.uniform(k, (out_dim,), jnp.float32, -bound, bound)

    mlp_dim = F * 2 ** (L - 1)   # 4F
    return {
        "user_gmf": jax.random.normal(ks[0], (NUM_USERS, F), jnp.float32) * 0.01,
        "item_gmf": jax.random.normal(ks[1], (NUM_ITEMS, F), jnp.float32) * 0.01,
        "user_mlp": jax.random.normal(ks[2], (NUM_USERS, mlp_dim), jnp.float32) * 0.01,
        "item_mlp": jax.random.normal(ks[3], (NUM_ITEMS, mlp_dim), jnp.float32) * 0.01,
        # layer i: Linear(F*2**(L-i), F*2**(L-i)//2)
        "w0": kaiming(ks[4], 4 * F, 8 * F), "b0": bias(ks[5], 4 * F, 8 * F),
        "w1": kaiming(ks[6], 2 * F, 4 * F), "b1": bias(ks[7], 2 * F, 4 * F),
        "w2": kaiming(ks[8], 1 * F, 2 * F), "b2": bias(ks[9], 1 * F, 2 * F),
        "wf": kaiming(ks[10], 1, 2 * F),    "bf": bias(ks[11], 1, 2 * F),
    }


def prepare_params(raw):
    """One-time preprocessing: transpose Linear weights to (in, out), split the
    final weight along its concat input, cast MLP weights/embeddings to bf16.
    TODO(synk): fp8 (e4m3 + per-channel scales) for w0/w1 on v7x would halve
    layer-0/1 weight DMA again; kept bf16 here for v5e/v6e portability."""
    F = NUM_FACTORS
    wf = raw["wf"].T                                                 # (2F, 1)
    return {
        "user_gmf": raw["user_gmf"],                                 # f32
        "item_gmf": raw["item_gmf"],                                 # f32
        "user_mlp": raw["user_mlp"].astype(jnp.bfloat16),            # (U, 4F) bf16
        "item_mlp": raw["item_mlp"].astype(jnp.bfloat16),            # (I, 4F) bf16
        "w0": raw["w0"].T.astype(jnp.bfloat16),                      # (8F, 4F) bf16
        "b0": raw["b0"].reshape(1, -1),                              # (1, 4F) f32
        "w1": raw["w1"].T.astype(jnp.bfloat16),                      # (4F, 2F) bf16
        "b1": raw["b1"].reshape(1, -1),                              # (1, 2F) f32
        "w2": raw["w2"].T.astype(jnp.bfloat16),                      # (2F, F)  bf16
        "b2": raw["b2"].reshape(1, -1),                              # (1, F)  f32
        "wf_gmf": wf[:F, 0].reshape(1, F),                           # (1, F)  f32
        "wf_mlp": wf[F:, 0].reshape(1, F),                           # (1, F)  f32
        "bf": raw["bf"].reshape(1, 1),                               # (1, 1)  f32
    }


def neumf_reference(p, user_idx, item_idx):
    """Pure-JAX reference using the same preprocessed params / dtypes."""
    ug = p["user_gmf"][user_idx]
    ig = p["item_gmf"][item_idx]
    gmf = ug * ig
    h = jnp.concatenate([p["user_mlp"][user_idx], p["item_mlp"][item_idx]], -1)
    h = jnp.maximum(jnp.dot(h, p["w0"], preferred_element_type=jnp.float32) + p["b0"], 0.0)
    h = jnp.maximum(jnp.dot(h.astype(jnp.bfloat16), p["w1"],
                            preferred_element_type=jnp.float32) + p["b1"], 0.0)
    h = jnp.maximum(jnp.dot(h.astype(jnp.bfloat16), p["w2"],
                            preferred_element_type=jnp.float32) + p["b2"], 0.0)
    return jnp.sum(gmf * p["wf_gmf"] + h * p["wf_mlp"], axis=-1) + p["bf"][0, 0]


if __name__ == "__main__":
    key = jax.random.PRNGKey(0)
    k_params, k_u, k_i = jax.random.split(key, 3)
    params = prepare_params(init_params(k_params))   # one-time layout/dtype prep

    user_idx = jax.random.randint(k_u, (BATCH,), 0, NUM_USERS, dtype=jnp.int32)
    item_idx = jax.random.randint(k_i, (BATCH,), 0, NUM_ITEMS, dtype=jnp.int32)

    fwd = jax.jit(neumf_forward)
    out = jax.block_until_ready(fwd(params, user_idx, item_idx))
    ref = jax.block_until_ready(neumf_reference(params, user_idx, item_idx))

    assert out.shape == (BATCH,)
    np.testing.assert_allclose(np.asarray(out), np.asarray(ref), rtol=1e-3, atol=1e-3)
    print("KERNEL_OK")
</pallas_src>

<mosaic_0001>
module attributes {stable_mosaic.version = 11 : i64} {
  func.func @neumf_kernel(%arg0: i32, %arg1: memref<16x128xf32, #tpu.memory_space<vmem>>, %arg2: memref<16x128xf32, #tpu.memory_space<vmem>>, %arg3: memref<16x1024xbf16, #tpu.memory_space<vmem>>, %arg4: memref<1024x512xbf16, #tpu.memory_space<vmem>>, %arg5: memref<1x512xf32, #tpu.memory_space<vmem>>, %arg6: memref<512x256xbf16, #tpu.memory_space<vmem>>, %arg7: memref<1x256xf32, #tpu.memory_space<vmem>>, %arg8: memref<256x128xbf16, #tpu.memory_space<vmem>>, %arg9: memref<1x128xf32, #tpu.memory_space<vmem>>, %arg10: memref<1x128xf32, #tpu.memory_space<vmem>>, %arg11: memref<1x128xf32, #tpu.memory_space<vmem>>, %arg12: memref<1x1xf32, #tpu.memory_space<vmem>>, %arg13: memref<16x1xf32, #tpu.memory_space<vmem>>) attributes {dimension_semantics = [#tpu.dimension_semantics<parallel>], iteration_bounds = array<i64: 4>, scalar_prefetch = 0 : i64, scratch_operands = 0 : i64, tpu.core_type = #tpu.core_type<tc>, window_params = [{transform_indices = @transform_0, window_bounds = array<i64: 16, 128>}, {transform_indices = @transform_1, window_bounds = array<i64: 16, 128>}, {transform_indices = @transform_2, window_bounds = array<i64: 16, 1024>}, {pipeline_mode = #tpu.pipeline_mode<synchronous>, transform_indices = @transform_3, window_bounds = array<i64: 1024, 512>}, {pipeline_mode = #tpu.pipeline_mode<synchronous>, transform_indices = @transform_4, window_bounds = array<i64: 1, 512>}, {pipeline_mode = #tpu.pipeline_mode<synchronous>, transform_indices = @transform_5, window_bounds = array<i64: 512, 256>}, {pipeline_mode = #tpu.pipeline_mode<synchronous>, transform_indices = @transform_6, window_bounds = array<i64: 1, 256>}, {pipeline_mode = #tpu.pipeline_mode<synchronous>, transform_indices = @transform_7, window_bounds = array<i64: 256, 128>}, {pipeline_mode = #tpu.pipeline_mode<synchronous>, transform_indices = @transform_8, window_bounds = array<i64: 1, 128>}, {pipeline_mode = #tpu.pipeline_mode<synchronous>, transform_indices = @transform_9, window_bounds = array<i64: 1, 128>}, {pipeline_mode = #tpu.pipeline_mode<synchronous>, transform_indices = @transform_10, window_bounds = array<i64: 1, 128>}, {pipeline_mode = #tpu.pipeline_mode<synchronous>, transform_indices = @transform_11, window_bounds = array<i64: 1, 1>}, {transform_indices = @transform_12, window_bounds = array<i64: 16, 1>}]} {
    %c0 = arith.constant 0 : index
    %c0_0 = arith.constant 0 : index
    %0 = vector.load %arg1[%c0, %c0_0] : memref<16x128xf32, #tpu.memory_space<vmem>>, vector<16x128xf32>
    %c0_1 = arith.constant 0 : index
    %c0_2 = arith.constant 0 : index
    %1 = vector.load %arg2[%c0_1, %c0_2] : memref<16x128xf32, #tpu.memory_space<vmem>>, vector<16x128xf32>
    %2 = arith.mulf %0, %1 : vector<16x128xf32>
    %c0_3 = arith.constant 0 : index
    %c0_4 = arith.constant 0 : index
    %3 = vector.load %arg3[%c0_3, %c0_4] : memref<16x1024xbf16, #tpu.memory_space<vmem>>, vector<16x1024xbf16>
    %c0_5 = arith.constant 0 : index
    %c0_6 = arith.constant 0 : index
    %4 = vector.load %arg4[%c0_5, %c0_6] : memref<1024x512xbf16, #tpu.memory_space<vmem>>, vector<1024x512xbf16>
    %cst = arith.constant dense<0.000000e+00> : vector<16x512xf32>
    %5 = tpu.matmul %3, %4, %cst {dimension_numbers = #tpu.dot_dimension_numbers<[1], [0], [0], [1], [0, 0, 1, 1], [], []>} : vector<16x1024xbf16>, vector<1024x512xbf16>, vector<16x512xf32> -> vector<16x512xf32>
    %c0_7 = arith.constant 0 : index
    %c0_8 = arith.constant 0 : index
    %6 = vector.load %arg5[%c0_7, %c0_8] : memref<1x512xf32, #tpu.memory_space<vmem>>, vector<1x512xf32>
    %7 = vector.broadcast %6 : vector<1x512xf32> to vector<16x512xf32>
    %8 = arith.addf %5, %7 : vector<16x512xf32>
    %cst_9 = arith.constant 0.000000e+00 : f32
    %9 = vector.broadcast %cst_9 : f32 to vector<16x512xf32>
    %10 = arith.maximumf %8, %9 : vector<16x512xf32>
    %11 = arith.truncf %10 : vector<16x512xf32> to vector<16x512xbf16>
    %c0_10 = arith.constant 0 : index
    %c0_11 = arith.constant 0 : index
    %12 = vector.load %arg6[%c0_10, %c0_11] : memref<512x256xbf16, #tpu.memory_space<vmem>>, vector<512x256xbf16>
    %cst_12 = arith.constant dense<0.000000e+00> : vector<16x256xf32>
    %13 = tpu.matmul %11, %12, %cst_12 {dimension_numbers = #tpu.dot_dimension_numbers<[1], [0], [0], [1], [0, 0, 1, 1], [], []>} : vector<16x512xbf16>, vector<512x256xbf16>, vector<16x256xf32> -> vector<16x256xf32>
    %c0_13 = arith.constant 0 : index
    %c0_14 = arith.constant 0 : index
    %14 = vector.load %arg7[%c0_13, %c0_14] : memref<1x256xf32, #tpu.memory_space<vmem>>, vector<1x256xf32>
    %15 = vector.broadcast %14 : vector<1x256xf32> to vector<16x256xf32>
    %16 = arith.addf %13, %15 : vector<16x256xf32>
    %cst_15 = arith.constant 0.000000e+00 : f32
    %17 = vector.broadcast %cst_15 : f32 to vector<16x256xf32>
    %18 = arith.maximumf %16, %17 : vector<16x256xf32>
    %19 = arith.truncf %18 : vector<16x256xf32> to vector<16x256xbf16>
    %c0_16 = arith.constant 0 : index
    %c0_17 = arith.constant 0 : index
    %20 = vector.load %arg8[%c0_16, %c0_17] : memref<256x128xbf16, #tpu.memory_space<vmem>>, vector<256x128xbf16>
    %cst_18 = arith.constant dense<0.000000e+00> : vector<16x128xf32>
    %21 = tpu.matmul %19, %20, %cst_18 {dimension_numbers = #tpu.dot_dimension_numbers<[1], [0], [0], [1], [0, 0, 1, 1], [], []>} : vector<16x256xbf16>, vector<256x128xbf16>, vector<16x128xf32> -> vector<16x128xf32>
    %c0_19 = arith.constant 0 : index
    %c0_20 = arith.constant 0 : index
    %22 = vector.load %arg9[%c0_19, %c0_20] : memref<1x128xf32, #tpu.memory_space<vmem>>, vector<1x128xf32>
    %23 = vector.broadcast %22 : vector<1x128xf32> to vector<16x128xf32>
    %24 = arith.addf %21, %23 : vector<16x128xf32>
    %cst_21 = arith.constant 0.000000e+00 : f32
    %25 = vector.broadcast %cst_21 : f32 to vector<16x128xf32>
    %26 = arith.maximumf %24, %25 : vector<16x128xf32>
    %c0_22 = arith.constant 0 : index
    %c0_23 = arith.constant 0 : index
    %27 = vector.load %arg10[%c0_22, %c0_23] : memref<1x128xf32, #tpu.memory_space<vmem>>, vector<1x128xf32>
    %28 = vector.broadcast %27 : vector<1x128xf32> to vector<16x128xf32>
    %29 = arith.mulf %2, %28 : vector<16x128xf32>
    %c0_24 = arith.constant 0 : index
    %c0_25 = arith.constant 0 : index
    %30 = vector.load %arg11[%c0_24, %c0_25] : memref<1x128xf32, #tpu.memory_space<vmem>>, vector<1x128xf32>
    %31 = vector.broadcast %30 : vector<1x128xf32> to vector<16x128xf32>
    %32 = arith.mulf %26, %31 : vector<16x128xf32>
    %33 = arith.addf %29, %32 : vector<16x128xf32>
    %cst_26 = arith.constant dense<0.000000e+00> : vector<16xf32>
    %34 = vector.multi_reduction <add>, %33, %cst_26 [1] : vector<16x128xf32> to vector<16xf32>
    %35 = vector.shape_cast %34 : vector<16xf32> to vector<16x1xf32>
    %c0_27 = arith.constant 0 : index
    %c0_28 = arith.constant 0 : index
    %36 = vector.load %arg12[%c0_27, %c0_28] : memref<1x1xf32, #tpu.memory_space<vmem>>, vector<1x1xf32>
    %37 = vector.broadcast %36 : vector<1x1xf32> to vector<16x1xf32>
    %38 = arith.addf %35, %37 : vector<16x1xf32>
    %c0_29 = arith.constant 0 : index
    %c0_30 = arith.constant 0 : index
    %39 = vector.load %arg13[%c0_29, %c0_30] : memref<16x1xf32, #tpu.memory_space<vmem>>, vector<16x1xf32>
    tpu.vector_store %arg13[%c0_29, %c0_30], %38 {strides = array<i32>} : memref<16x1xf32, #tpu.memory_space<vmem>>, vector<16x1xf32>,
    return
  }
  func.func @transform_0(%arg0: i32) -> (i32, i32) {
    %c0_i32 = arith.constant 0 : i32
    %c0_i32_0 = arith.constant 0 : i32
    return %arg0, %c0_i32 : i32, i32
  }
  func.func @transform_1(%arg0: i32) -> (i32, i32) {
    %c0_i32 = arith.constant 0 : i32
    %c0_i32_0 = arith.constant 0 : i32
    return %arg0, %c0_i32 : i32, i32
  }
  func.func @transform_2(%arg0: i32) -> (i32, i32) {
    %c0_i32 = arith.constant 0 : i32
    %c0_i32_0 = arith.constant 0 : i32
    return %arg0, %c0_i32 : i32, i32
  }
  func.func @transform_3(%arg0: i32) -> (i32, i32) {
    %c0_i32 = arith.constant 0 : i32
    %c0_i32_0 = arith.constant 0 : i32
    %c0_i32_1 = arith.constant 0 : i32
    return %c0_i32, %c0_i32_0 : i32, i32
  }
  func.func @transform_4(%arg0: i32) -> (i32, i32) {
    %c0_i32 = arith.constant 0 : i32
    %c0_i32_0 = arith.constant 0 : i32
    %c0_i32_1 = arith.constant 0 : i32
    return %c0_i32, %c0_i32_0 : i32, i32
  }
  func.func @transform_5(%arg0: i32) -> (i32, i32) {
    %c0_i32 = arith.constant 0 : i32
    %c0_i32_0 = arith.constant 0 : i32
    %c0_i32_1 = arith.constant 0 : i32
    return %c0_i32, %c0_i32_0 : i32, i32
  }
  func.func @transform_6(%arg0: i32) -> (i32, i32) {
    %c0_i32 = arith.constant 0 : i32
    %c0_i32_0 = arith.constant 0 : i32
    %c0_i32_1 = arith.constant 0 : i32
    return %c0_i32, %c0_i32_0 : i32, i32
  }
  func.func @transform_7(%arg0: i32) -> (i32, i32) {
    %c0_i32 = arith.constant 0 : i32
    %c0_i32_0 = arith.constant 0 : i32
    %c0_i32_1 = arith.constant 0 : i32
    return %c0_i32, %c0_i32_0 : i32, i32
  }
  func.func @transform_8(%arg0: i32) -> (i32, i32) {
    %c0_i32 = arith.constant 0 : i32
    %c0_i32_0 = arith.constant 0 : i32
    %c0_i32_1 = arith.constant 0 : i32
    return %c0_i32, %c0_i32_0 : i32, i32
  }
  func.func @transform_9(%arg0: i32) -> (i32, i32) {
    %c0_i32 = arith.constant 0 : i32
    %c0_i32_0 = arith.constant 0 : i32
    %c0_i32_1 = arith.constant 0 : i32
    return %c0_i32, %c0_i32_0 : i32, i32
  }
  func.func @transform_10(%arg0: i32) -> (i32, i32) {
    %c0_i32 = arith.constant 0 : i32
    %c0_i32_0 = arith.constant 0 : i32
    %c0_i32_1 = arith.constant 0 : i32
    return %c0_i32, %c0_i32_0 : i32, i32
  }
  func.func @transform_11(%arg0: i32) -> (i32, i32) {
    %c0_i32 = arith.constant 0 : i32
    %c0_i32_0 = arith.constant 0 : i32
    %c0_i32_1 = arith.constant 0 : i32
    return %c0_i32, %c0_i32_0 : i32, i32
  }
  func.func @transform_12(%arg0: i32) -> (i32, i32) {
    %c0_i32 = arith.constant 0 : i32
    %c0_i32_0 = arith.constant 0 : i32
    return %arg0, %c0_i32 : i32, i32
  }
}

</mosaic_0001>

<llo_original>
// kernel: neumf_forward.1
$region0: #{neumf_forward.1}
  #allocation0 [shape = 'u32[]', space=smem, size = 0x4, offset = 0x4, fixed_abs, tag = 'smem constant byte address 0x4 - core index']
  #allocation1 [shape = 'u32[72,128]{1,0:T(1,128)}', space=vmem, size = 0x9000, scoped, tag = 'internal scratch']
  #allocation2 [shape = 'f32[1,1]{1,0:T(1,128)S(1)}', space=vmem, size = 0x200, scoped, tag = 'scoped memory for neumf_forward.1']
  %s0 = inlined_call_operand.vmem [shape: f32[64,128], index: 0, kind: input, shape index: {}]
  %s1 = inlined_call_operand.vmem [shape: f32[64,128], index: 1, kind: input, shape index: {}]
  %s2 = inlined_call_operand.vmem [shape: bf16[64,1024], index: 2, kind: input, shape index: {}]
  %s3 = inlined_call_operand.vmem [shape: bf16[1024,512], index: 3, kind: input, shape index: {}]
  %s4 = inlined_call_operand.vmem [shape: f32[1,512], index: 4, kind: input, shape index: {}]
  %s5 = inlined_call_operand.vmem [shape: bf16[512,256], index: 5, kind: input, shape index: {}]
  %s6 = inlined_call_operand.vmem [shape: f32[1,256], index: 6, kind: input, shape index: {}]
  %s7 = inlined_call_operand.vmem [shape: bf16[256,128], index: 7, kind: input, shape index: {}]
  %s8 = inlined_call_operand.vmem [shape: f32[1,128], index: 8, kind: input, shape index: {}]
  %s9 = inlined_call_operand.vmem [shape: f32[1,128], index: 9, kind: input, shape index: {}]
  %s10 = inlined_call_operand.vmem [shape: f32[1,128], index: 10, kind: input, shape index: {}]
  %s11 = inlined_call_operand.<no memory space> [shape: f32[1,1], index: 11, kind: input, shape index: {}]
  %s12 = inlined_call_operand.vmem [shape: f32[64,1], index: 12, kind: output, shape index: {}]
  %s13 = sld [smem:[#allocation0]]
  $region81: #{neumf_forward.1} parent=0
    _
  %s15 = ssub.s32 1, %s13
  %s16 = scalar_select 0, %s15, %s13
  %v17 = vstv %s11
  %18 = vst [vmem:[#allocation2] sm:$0x1] %v17
  loop: start=0, step=1, limit=6
  $region2: #{neumf_forward.1} parent=0 // loop_pre_header
    _
  $region3: #{neumf_forward.1} parent=0 // loop_header
    %s20 = sphi 0, %s24
    %p21 = scmp.ge.s32.totalorder %s20, 6
    %s30 = sphi 0, %s32
    %s33 = sphi 0, %s30
    %s34 = sphi 0, %s33
    %s50 = sphi 0, %s34
    %s56 = sphi 0, %s58
    %s59 = sphi 0, %s56
    %s60 = sphi 0, %s59
    %s76 = sphi 0, %s60
    %s82 = sphi 0, %s84
    %s85 = sphi 0, %s82
    %s86 = sphi 0, %s85
    %s102 = sphi 0, %s86
    %s106 = sphi 0, %s106
    %s108 = sphi 0, %s106
    %s109 = sphi 0, %s108
    %s123 = sphi 0, %s109
    %s127 = sphi 0, %s127
    %s129 = sphi 0, %s127
    %s130 = sphi 0, %s129
    %s144 = sphi 0, %s130
    %s148 = sphi 0, %s148
    %s150 = sphi 0, %s148
    %s151 = sphi 0, %s150
    %s165 = sphi 0, %s151
    %s169 = sphi 0, %s169
    %s171 = sphi 0, %s169
    %s172 = sphi 0, %s171
    %s186 = sphi 0, %s172
    %s190 = sphi 0, %s190
    %s192 = sphi 0, %s190
    %s193 = sphi 0, %s192
    %s207 = sphi 0, %s193
    %s211 = sphi 0, %s211
    %s213 = sphi 0, %s211
    %s214 = sphi 0, %s213
    %s228 = sphi 0, %s214
    %s232 = sphi 0, %s232
    %s234 = sphi 0, %s232
    %s235 = sphi 0, %s234
    %s249 = sphi 0, %s235
    %s253 = sphi 0, %s253
    %s255 = sphi 0, %s253
    %s256 = sphi 0, %s255
    %s270 = sphi 0, %s256
    %s274 = sphi 0, %s274
    %s276 = sphi 0, %s274
    %s277 = sphi 0, %s276
    %s291 = sphi 0, %s277
    %s297 = sphi 0, %s299
    %s300 = sphi 0, %s297
    %s301 = sphi 0, %s300
    %s317 = sphi 0, %s301
  $region4: #{neumf_forward.1} parent=0 // loop_header_branch
    %23 = sbr.rel (%p21) target = $region8
  $region5: #{neumf_forward.1} parent=0 // loop_body
    %s25 = ssub.s32 %s20, 1
    %s26 = ssub.s32 %s20, 2
    %s27 = sadd.s32 %s20, 1
    %s28 = ssub.s32 %s20, %s27
    %p29 = scmp.eq.s32.totalorder %s28, 0
    %s31 = sadd.s32 %s30, 1
    %s32 = scalar_select %p29, %s30, %s31
    %p35 = pneg %p29
    %p36 = scmp.eq.s32.totalorder %s20, 3
    %p37 = por %p35, %p36
    %p38 = scmp.ne.s32.totalorder %s30, %s33
    %p39 = scmp.eq.s32.totalorder %s20, 0
    %p40 = por %p38, %p39
    %p41 = scmp.ne.s32.totalorder %s30, %s33
    %p42 = scmp.eq.s32.totalorder %s25, 3
    %p43 = por %p41, %p42
    %p44 = scmp.ne.s32.totalorder %s33, %s34
    %p45 = scmp.eq.s32.totalorder %s25, 0
    %p46 = por %p44, %p45
    %p47 = scmp.ne.s32.totalorder %s33, %s34
    %p48 = scmp.eq.s32.totalorder %s26, 3
    %p49 = por %p47, %p48
    %p51 = scmp.ne.s32.totalorder %s34, %s50
    %p52 = scmp.eq.s32.totalorder %s26, 0
    %p53 = por %p51, %p52
    %s54 = ssub.s32 %s20, %s27
    %p55 = scmp.eq.s32.totalorder %s54, 0
    %s57 = sadd.s32 %s56, 1
    %s58 = scalar_select %p55, %s56, %s57
    %p61 = pneg %p55
    %p62 = scmp.eq.s32.totalorder %s20, 3
    %p63 = por %p61, %p62
    %p64 = scmp.ne.s32.totalorder %s56, %s59
    %p65 = scmp.eq.s32.totalorder %s20, 0
    %p66 = por %p64, %p65
    %p67 = scmp.ne.s32.totalorder %s56, %s59
    %p68 = scmp.eq.s32.totalorder %s25, 3
    %p69 = por %p67, %p68
    %p70 = scmp.ne.s32.totalorder %s59, %s60
    %p71 = scmp.eq.s32.totalorder %s25, 0
    %p72 = por %p70, %p71
    %p73 = scmp.ne.s32.totalorder %s59, %s60
    %p74 = scmp.eq.s32.totalorder %s26, 3
    %p75 = por %p73, %p74
    %p77 = scmp.ne.s32.totalorder %s60, %s76
    %p78 = scmp.eq.s32.totalorder %s26, 0
    %p79 = por %p77, %p78
    %s80 = ssub.s32 %s20, %s27
    %p81 = scmp.eq.s32.totalorder %s80, 0
    %s83 = sadd.s32 %s82, 1
    %s84 = scalar_select %p81, %s82, %s83
    %p87 = pneg %p81
    %p88 = scmp.eq.s32.totalorder %s20, 3
    %p89 = por %p87, %p88
    %p90 = scmp.ne.s32.totalorder %s82, %s85
    %p91 = scmp.eq.s32.totalorder %s20, 0
    %p92 = por %p90, %p91
    %p93 = scmp.ne.s32.totalorder %s82, %s85
    %p94 = scmp.eq.s32.totalorder %s25, 3
    %p95 = por %p93, %p94
    %p96 = scmp.ne.s32.totalorder %s85, %s86
    %p97 = scmp.eq.s32.totalorder %s25, 0
    %p98 = por %p96, %p97
    %p99 = scmp.ne.s32.totalorder %s85, %s86
    %p100 = scmp.eq.s32.totalorder %s26, 3
    %p101 = por %p99, %p100
    %p103 = scmp.ne.s32.totalorder %s86, %s102
    %p104 = scmp.eq.s32.totalorder %s26, 0
    %p105 = por %p103, %p104
    %s107 = sadd.s32 %s106, 1
    %p110 = scmp.eq.s32.totalorder %s20, 3
    %p111 = scmp.ne.s32.totalorder %s106, %s108
    %p112 = scmp.eq.s32.totalorder %s20, 0
    %p113 = por %p111, %p112
    %p114 = scmp.ne.s32.totalorder %s106, %s108
    %p115 = scmp.eq.s32.totalorder %s25, 3
    %p116 = por %p114, %p115
    %p117 = scmp.ne.s32.totalorder %s108, %s109
    %p118 = scmp.eq.s32.totalorder %s25, 0
    %p119 = por %p117, %p118
    %p120 = scmp.ne.s32.totalorder %s108, %s109
    %p121 = scmp.eq.s32.totalorder %s26, 3
    %p122 = por %p120, %p121
    %p124 = scmp.ne.s32.totalorder %s109, %s123
    %p125 = scmp.eq.s32.totalorder %s26, 0
    %p126 = por %p124, %p125
    %s128 = sadd.s32 %s127, 1
    %p131 = scmp.eq.s32.totalorder %s20, 3
    %p132 = scmp.ne.s32.totalorder %s127, %s129
    %p133 = scmp.eq.s32.totalorder %s20, 0
    %p134 = por %p132, %p133
    %p135 = scmp.ne.s32.totalorder %s127, %s129
    %p136 = scmp.eq.s32.totalorder %s25, 3
    %p137 = por %p135, %p136
    %p138 = scmp.ne.s32.totalorder %s129, %s130
    %p139 = scmp.eq.s32.totalorder %s25, 0
    %p140 = por %p138, %p139
    %p141 = scmp.ne.s32.totalorder %s129, %s130
    %p142 = scmp.eq.s32.totalorder %s26, 3
    %p143 = por %p141, %p142
    %p145 = scmp.ne.s32.totalorder %s130, %s144
    %p146 = scmp.eq.s32.totalorder %s26, 0
    %p147 = por %p145, %p146
    %s149 = sadd.s32 %s148, 1
    %p152 = scmp.eq.s32.totalorder %s20, 3
    %p153 = scmp.ne.s32.totalorder %s148, %s150
    %p154 = scmp.eq.s32.totalorder %s20, 0
    %p155 = por %p153, %p154
    %p156 = scmp.ne.s32.totalorder %s148, %s150
    %p157 = scmp.eq.s32.totalorder %s25, 3
    %p158 = por %p156, %p157
    %p159 = scmp.ne.s32.totalorder %s150, %s151
    %p160 = scmp.eq.s32.totalorder %s25, 0
    %p161 = por %p159, %p160
    %p162 = scmp.ne.s32.totalorder %s150, %s151
    %p163 = scmp.eq.s32.totalorder %s26, 3
    %p164 = por %p162, %p163
    %p166 = scmp.ne.s32.totalorder %s151, %s165
    %p167 = scmp.eq.s32.totalorder %s26, 0
    %p168 = por %p166, %p167
    %s170 = sadd.s32 %s169, 1
    %p173 = scmp.eq.s32.totalorder %s20, 3
    %p174 = scmp.ne.s32.totalorder %s169, %s171
    %p175 = scmp.eq.s32.totalorder %s20, 0
    %p176 = por %p174, %p175
    %p177 = scmp.ne.s32.totalorder %s169, %s171
    %p178 = scmp.eq.s32.totalorder %s25, 3
    %p179 = por %p177, %p178
    %p180 = scmp.ne.s32.totalorder %s171, %s172
    %p181 = scmp.eq.s32.totalorder %s25, 0
    %p182 = por %p180, %p181
    %p183 = scmp.ne.s32.totalorder %s171, %s172
    %p184 = scmp.eq.s32.totalorder %s26, 3
    %p185 = por %p183, %p184
    %p187 = scmp.ne.s32.totalorder %s172, %s186
    %p188 = scmp.eq.s32.totalorder %s26, 0
    %p189 = por %p187, %p188
    %s191 = sadd.s32 %s190, 1
    %p194 = scmp.eq.s32.totalorder %s20, 3
    %p195 = scmp.ne.s32.totalorder %s190, %s192
    %p196 = scmp.eq.s32.totalorder %s20, 0
    %p197 = por %p195, %p196
    %p198 = scmp.ne.s32.totalorder %s190, %s192
    %p199 = scmp.eq.s32.totalorder %s25, 3
    %p200 = por %p198, %p199
    %p201 = scmp.ne.s32.totalorder %s192, %s193
    %p202 = scmp.eq.s32.totalorder %s25, 0
    %p203 = por %p201, %p202
    %p204 = scmp.ne.s32.totalorder %s192, %s193
    %p205 = scmp.eq.s32.totalorder %s26, 3
    %p206 = por %p204, %p205
    %p208 = scmp.ne.s32.totalorder %s193, %s207
    %p209 = scmp.eq.s32.totalorder %s26, 0
    %p210 = por %p208, %p209
    %s212 = sadd.s32 %s211, 1
    %p215 = scmp.eq.s32.totalorder %s20, 3
    %p216 = scmp.ne.s32.totalorder %s211, %s213
    %p217 = scmp.eq.s32.totalorder %s20, 0
    %p218 = por %p216, %p217
    %p219 = scmp.ne.s32.totalorder %s211, %s213
    %p220 = scmp.eq.s32.totalorder %s25, 3
    %p221 = por %p219, %p220
    %p222 = scmp.ne.s32.totalorder %s213, %s214
    %p223 = scmp.eq.s32.totalorder %s25, 0
    %p224 = por %p222, %p223
    %p225 = scmp.ne.s32.totalorder %s213, %s214
    %p226 = scmp.eq.s32.totalorder %s26, 3
    %p227 = por %p225, %p226
    %p229 = scmp.ne.s32.totalorder %s214, %s228
    %p230 = scmp.eq.s32.totalorder %s26, 0
    %p231 = por %p229, %p230
    %s233 = sadd.s32 %s232, 1
    %p236 = scmp.eq.s32.totalorder %s20, 3
    %p237 = scmp.ne.s32.totalorder %s232, %s234
    %p238 = scmp.eq.s32.totalorder %s20, 0
    %p239 = por %p237, %p238
    %p240 = scmp.ne.s32.totalorder %s232, %s234
    %p241 = scmp.eq.s32.totalorder %s25, 3
    %p242 = por %p240, %p241
    %p243 = scmp.ne.s32.totalorder %s234, %s235
    %p244 = scmp.eq.s32.totalorder %s25, 0
    %p245 = por %p243, %p244
    %p246 = scmp.ne.s32.totalorder %s234, %s235
    %p247 = scmp.eq.s32.totalorder %s26, 3
    %p248 = por %p246, %p247
    %p250 = scmp.ne.s32.totalorder %s235, %s249
    %p251 = scmp.eq.s32.totalorder %s26, 0
    %p252 = por %p250, %p251
    %s254 = sadd.s32 %s253, 1
    %p257 = scmp.eq.s32.totalorder %s20, 3
    %p258 = scmp.ne.s32.totalorder %s253, %s255
    %p259 = scmp.eq.s32.totalorder %s20, 0
    %p260 = por %p258, %p259
    %p261 = scmp.ne.s32.totalorder %s253, %s255
    %p262 = scmp.eq.s32.totalorder %s25, 3
    %p263 = por %p261, %p262
    %p264 = scmp.ne.s32.totalorder %s255, %s256
    %p265 = scmp.eq.s32.totalorder %s25, 0
    %p266 = por %p264, %p265
    %p267 = scmp.ne.s32.totalorder %s255, %s256
    %p268 = scmp.eq.s32.totalorder %s26, 3
    %p269 = por %p267, %p268
    %p271 = scmp.ne.s32.totalorder %s256, %s270
    %p272 = scmp.eq.s32.totalorder %s26, 0
    %p273 = por %p271, %p272
    %s275 = sadd.s32 %s274, 1
    %p278 = scmp.eq.s32.totalorder %s20, 3
    %p279 = scmp.ne.s32.totalorder %s274, %s276
    %p280 = scmp.eq.s32.totalorder %s20, 0
    %p281 = por %p279, %p280
    %p282 = scmp.ne.s32.totalorder %s274, %s276
    %p283 = scmp.eq.s32.totalorder %s25, 3
    %p284 = por %p282, %p283
    %p285 = scmp.ne.s32.totalorder %s276, %s277
    %p286 = scmp.eq.s32.totalorder %s25, 0
    %p287 = por %p285, %p286
    %p288 = scmp.ne.s32.totalorder %s276, %s277
    %p289 = scmp.eq.s32.totalorder %s26, 3
    %p290 = por %p288, %p289
    %p292 = scmp.ne.s32.totalorder %s277, %s291
    %p293 = scmp.eq.s32.totalorder %s26, 0
    %p294 = por %p292, %p293
    %s295 = ssub.s32 %s20, %s27
    %p296 = scmp.eq.s32.totalorder %s295, 0
    %s298 = sadd.s32 %s297, 1
    %s299 = scalar_select %p296, %s297, %s298
    %p302 = pneg %p296
    %p303 = scmp.eq.s32.totalorder %s20, 3
    %p304 = por %p302, %p303
    %p305 = scmp.ne.s32.totalorder %s297, %s300
    %p306 = scmp.eq.s32.totalorder %s20, 0
    %p307 = por %p305, %p306
    %p308 = scmp.ne.s32.totalorder %s297, %s300
    %p309 = scmp.eq.s32.totalorder %s25, 3
    %p310 = por %p308, %p309
    %p311 = scmp.ne.s32.totalorder %s300, %s301
    %p312 = scmp.eq.s32.totalorder %s25, 0
    %p313 = por %p311, %p312
    %p314 = scmp.ne.s32.totalorder %s300, %s301
    %p315 = scmp.eq.s32.totalorder %s26, 3
    %p316 = por %p314, %p315
    %p318 = scmp.ne.s32.totalorder %s301, %s317
    %p319 = scmp.eq.s32.totalorder %s26, 0
    %p320 = por %p318, %p319
    %p321 = scmp.le.s32.totalorder 1, %s20
    %p322 = scmp.lt.s32.totalorder %s20, 5
    %p323 = pnand %p321, %p322
    %p324 = pneg %p323
    // Predicated region
    $region9: #{neumf_forward.1} parent=5 // pred_check
      _
    $region10: #{neumf_forward.1} parent=5 // pred_check_branch
      %326 = sbr.rel (%p323) target = $region12
    $region11: #{neumf_forward.1} parent=5 // pred_region
      %s327 = ssub.s32 %s20, 1
      // Predicated region
      $region13: #{neumf_forward.1} parent=11 // pred_check
        %p328 = pneg %p119
      $region14: #{neumf_forward.1} parent=11 // pred_check_branch
        %330 = sbr.rel (%p328) target = $region16
      $region15: #{neumf_forward.1} parent=11 // pred_region
        _
      $region16: #{neumf_forward.1} parent=11 // pred_fallthru
        _
      // Predicated region
      $region17: #{neumf_forward.1} parent=11 // pred_check
        %p331 = pneg %p140
      $region18: #{neumf_forward.1} parent=11 // pred_check_branch
        %333 = sbr.rel (%p331) target = $region20
      $region19: #{neumf_forward.1} parent=11 // pred_region
        _
      $region20: #{neumf_forward.1} parent=11 // pred_fallthru
        _
      // Predicated region
      $region21: #{neumf_forward.1} parent=11 // pred_check
        %p334 = pneg %p161
      $region22: #{neumf_forward.1} parent=11 // pred_check_branch
        %336 = sbr.rel (%p334) target = $region24
      $region23: #{neumf_forward.1} parent=11 // pred_region
        _
      $region24: #{neumf_forward.1} parent=11 // pred_fallthru
        _
      // Predicated region
      $region25: #{neumf_forward.1} parent=11 // pred_check
        %p337 = pneg %p182
      $region26: #{neumf_forward.1} parent=11 // pred_check_branch
        %339 = sbr.rel (%p337) target = $region28
      $region27: #{neumf_forward.1} parent=11 // pred_region
        _
      $region28: #{neumf_forward.1} parent=11 // pred_fallthru
        _
      // Predicated region
      $region29: #{neumf_forward.1} parent=11 // pred_check
        %p340 = pneg %p203
      $region30: #{neumf_forward.1} parent=11 // pred_check_branch
        %342 = sbr.rel (%p340) target = $region32
      $region31: #{neumf_forward.1} parent=11 // pred_region
        _
      $region32: #{neumf_forward.1} parent=11 // pred_fallthru
        _
      // Predicated region
      $region33: #{neumf_forward.1} parent=11 // pred_check
        %p343 = pneg %p224
      $region34: #{neumf_forward.1} parent=11 // pred_check_branch
        %345 = sbr.rel (%p343) target = $region36
      $region35: #{neumf_forward.1} parent=11 // pred_region
        _
      $region36: #{neumf_forward.1} parent=11 // pred_fallthru
        _
      // Predicated region
      $region37: #{neumf_forward.1} parent=11 // pred_check
        %p346 = pneg %p245
      $region38: #{neumf_forward.1} parent=11 // pred_check_branch
        %348 = sbr.rel (%p346) target = $region40
      $region39: #{neumf_forward.1} parent=11 // pred_region
        _
      $region40: #{neumf_forward.1} parent=11 // pred_fallthru
        _
      // Predicated region
      $region41: #{neumf_forward.1} parent=11 // pred_check
        %p349 = pneg %p266
      $region42: #{neumf_forward.1} parent=11 // pred_check_branch
        %351 = sbr.rel (%p349) target = $region44
      $region43: #{neumf_forward.1} parent=11 // pred_region
        _
      $region44: #{neumf_forward.1} parent=11 // pred_fallthru
        _
      // Predicated region
      $region45: #{neumf_forward.1} parent=11 // pred_check
        %p352 = pneg %p287
      $region46: #{neumf_forward.1} parent=11 // pred_check_branch
        %354 = sbr.rel (%p352) target = $region48
      $region47: #{neumf_forward.1} parent=11 // pred_region
        _
      $region48: #{neumf_forward.1} parent=11 // pred_fallthru
        _
    $region12: #{neumf_forward.1} parent=5 // pred_fallthru
      _
    %p355 = scmp.lt.s32.totalorder %s20, 4
    // Predicated region
    $region49: #{neumf_forward.1} parent=5 // pred_check
      %p356 = pneg %p355
    $region50: #{neumf_forward.1} parent=5 // pred_check_branch
      %358 = sbr.rel (%p356) target = $region52
    $region51: #{neumf_forward.1} parent=5 // pred_region
      // Predicated region
      $region53: #{neumf_forward.1} parent=51 // pred_check
        %p359 = pneg %p40
      $region54: #{neumf_forward.1} parent=51 // pred_check_branch
        %361 = sbr.rel (%p359) target = $region56
      $region55: #{neumf_forward.1} parent=51 // pred_region
        %s362 = smul.u32 2, %s20
        %p363 = scmp.lt.s32.totalorder %s362, 7
        %s364 = scalar_select %p363, %s362, 7
        %s365 = smul.addr %s364, 8
        %s366 = scalar_lea.vmem %s0, %s365
        %s367 = smul.u32 2, %s20
      $region56: #{neumf_forward.1} parent=51 // pred_fallthru
        _
      // Predicated region
      $region57: #{neumf_forward.1} parent=51 // pred_check
        %p368 = pneg %p66
      $region58: #{neumf_forward.1} parent=51 // pred_check_branch
        %370 = sbr.rel (%p368) target = $region60
      $region59: #{neumf_forward.1} parent=51 // pred_region
        %s371 = smul.u32 2, %s20
        %p372 = scmp.lt.s32.totalorder %s371, 7
        %s373 = scalar_select %p372, %s371, 7
        %s374 = smul.addr %s373, 8
        %s375 = scalar_lea.vmem %s1, %s374
        %s376 = smul.u32 2, %s20
      $region60: #{neumf_forward.1} parent=51 // pred_fallthru
        _
      // Predicated region
      $region61: #{neumf_forward.1} parent=51 // pred_check
        %p377 = pneg %p92
      $region62: #{neumf_forward.1} parent=51 // pred_check_branch
        %379 = sbr.rel (%p377) target = $region64
      $region63: #{neumf_forward.1} parent=51 // pred_region
        %s380 = smul.u32 2, %s20
        %p381 = scmp.lt.s32.totalorder %s380, 7
        %s382 = scalar_select %p381, %s380, 7
        %s383 = smul.addr %s382, 8
        %s384 = smul.addr %s383, 4
        %s385 = scalar_lea.vmem %s2, %s384
        %s386 = smul.u32 2, %s20
      $region64: #{neumf_forward.1} parent=51 // pred_fallthru
        _
    $region52: #{neumf_forward.1} parent=5 // pred_fallthru
      _
    %p387 = scmp.le.s32.totalorder 1, %s20
    %p388 = scmp.lt.s32.totalorder %s20, 5
    %p389 = pnand %p387, %p388
    %p390 = pneg %p389
    // Predicated region
    $region65: #{neumf_forward.1} parent=5 // pred_check
      _
    $region66: #{neumf_forward.1} parent=5 // pred_check_branch
      %392 = sbr.rel (%p389) target = $region68
    $region67: #{neumf_forward.1} parent=5 // pred_region
      %s393 = ssub.s32 %s20, 1
      %s394 = smul.u32 2, %s25
      %p395 = scmp.lt.s32.totalorder %s394, 7
      %s396 = scalar_select %p395, %s394, 7
      %s397 = smul.addr %s396, 8
      %s398 = scalar_lea.vmem %s0, %s397
      %p399 = pneg %p46
      %p400 = pneg %p43
      %s401 = smul.u32 2, %s25
      %p402 = scmp.lt.s32.totalorder %s401, 7
      %s403 = scalar_select %p402, %s401, 7
      %s404 = smul.addr %s403, 8
      %s405 = scalar_lea.vmem %s1, %s404
      %p406 = pneg %p72
      %p407 = pneg %p69
      %s408 = smul.u32 2, %s25
      %p409 = scmp.lt.s32.totalorder %s408, 7
      %s410 = scalar_select %p409, %s408, 7
      %s411 = smul.addr %s410, 8
      %s412 = smul.addr %s411, 4
      %s413 = scalar_lea.vmem %s2, %s412
      %p414 = pneg %p98
      %p415 = pneg %p95
      %p416 = pneg %p119
      %p417 = pneg %p116
      %p418 = pneg %p140
      %p419 = pneg %p137
      %p420 = pneg %p161
      %p421 = pneg %p158
      %p422 = pneg %p182
      %p423 = pneg %p179
      %p424 = pneg %p203
      %p425 = pneg %p200
      %p426 = pneg %p224
      %p427 = pneg %p221
      %p428 = pneg %p245
      %p429 = pneg %p242
      %p430 = pneg %p266
      %p431 = pneg %p263
      %p432 = pneg %p287
      %p433 = pneg %p284
      %p434 = pneg %p313
      %p435 = pneg %p310
      %s436 = smul.u32 2, %s25
      %p437 = scmp.lt.s32.totalorder %s436, 7
      %s438 = scalar_select %p437, %s436, 7
      %s439 = smul.addr %s438, 8
      %s440 = scalar_lea.vmem %s12, %s439
      %s441 = smul.u32 2, %s25
      %p442 = scmp.lt.s32.totalorder %s441, 7
      %s443 = scalar_select %p442, %s441, 7
      %s444 = smul.addr %s443, 8
      %s445 = scalar_lea.vmem %s0, %s444
      %s446 = smul.u32 2, %s25
      %s447 = smul.u32 2, %s25
      %p448 = scmp.lt.s32.totalorder %s447, 7
      %s449 = scalar_select %p448, %s447, 7
      %s450 = smul.addr %s449, 8
      %s451 = scalar_lea.vmem %s1, %s450
      %s452 = smul.u32 2, %s25
      %s453 = smul.u32 2, %s25
      %p454 = scmp.lt.s32.totalorder %s453, 7
      %s455 = scalar_select %p454, %s453, 7
      %s456 = smul.addr %s455, 8
      %s457 = smul.addr %s456, 4
      %s458 = scalar_lea.vmem %s2, %s457
      %s459 = smul.u32 2, %s25
      %s460 = smul.u32 2, %s25
      %p461 = scmp.lt.s32.totalorder %s460, 7
      %s462 = scalar_select %p461, %s460, 7
      %s463 = smul.addr %s462, 8
      %s464 = scalar_lea.vmem %s12, %s463
      %s465 = smul.u32 2, %s25
      %v466 = vld [vmem:[%s445] sm:$0xff]
      %v467 = vld [vmem:[%s445 + $0x8] sm:$0xff]
      %v468 = vld [vmem:[%s451] sm:$0xff]
      %v469 = vld [vmem:[%s451 + $0x8] sm:$0xff]
      %v470 = vmul.f32 %v466, %v468
      %v471 = vmul.f32 %v467, %v469
      %v472 = vld [vmem:[%s458] sm:$0xff]
      %v473 = vld [vmem:[%s458 + $0x8] sm:$0xff]
      %v474 = vld [vmem:[%s458 + $0x10] sm:$0xff]
      %v475 = vld [vmem:[%s458 + $0x18] sm:$0xff]
      %v476 = vld [vmem:[%s458 + $0x20] sm:$0xff]
      %v477 = vld [vmem:[%s458 + $0x28] sm:$0xff]
      %v478 = vld [vmem:[%s458 + $0x30] sm:$0xff]
      %v479 = vld [vmem:[%s458 + $0x38] sm:$0xff]
      %v480 = vld [vmem:[%s3] sm:$0xff]
      %v481 = vld [vmem:[%s3 + $0x8] sm:$0xff]
      %v482 = vld [vmem:[%s3 + $0x10] sm:$0xff]
      %v483 = vld [vmem:[%s3 + $0x18] sm:$0xff]
      %v484 = vld [vmem:[%s3 + $0x20] sm:$0xff]
      %v485 = vld [vmem:[%s3 + $0x28] sm:$0xff]
      %v486 = vld [vmem:[%s3 + $0x30] sm:$0xff]
      %v487 = vld [vmem:[%s3 + $0x38] sm:$0xff]
      %v488 = vld [vmem:[%s3 + $0x40] sm:$0xff]
      %v489 = vld [vmem:[%s3 + $0x48] sm:$0xff]
      %v490 = vld [vmem:[%s3 + $0x50] sm:$0xff]
      %v491 = vld [vmem:[%s3 + $0x58] sm:$0xff]
      %v492 = vld [vmem:[%s3 + $0x60] sm:$0xff]
      %v493 = vld [vmem:[%s3 + $0x68] sm:$0xff]
      %v494 = vld [vmem:[%s3 + $0x70] sm:$0xff]
      %v495 = vld [vmem:[%s3 + $0x78] sm:$0xff]
      %v496 = vld [vmem:[%s3 + $0x80] sm:$0xff]
      %v497 = vld [vmem:[%s3 + $0x88] sm:$0xff]
      %v498 = vld [vmem:[%s3 + $0x90] sm:$0xff]
      %v499 = vld [vmem:[%s3 + $0x98] sm:$0xff]
      %v500 = vld [vmem:[%s3 + $0xa0] sm:$0xff]
      %v501 = vld [vmem:[%s3 + $0xa8] sm:$0xff]
      %v502 = vld [vmem:[%s3 + $0xb0] sm:$0xff]
      %v503 = vld [vmem:[%s3 + $0xb8] sm:$0xff]
      %v504 = vld [vmem:[%s3 + $0xc0] sm:$0xff]
      %v505 = vld [vmem:[%s3 + $0xc8] sm:$0xff]
      %v506 = vld [vmem:[%s3 + $0xd0] sm:$0xff]
      %v507 = vld [vmem:[%s3 + $0xd8] sm:$0xff]
      %v508 = vld [vmem:[%s3 + $0xe0] sm:$0xff]
      %v509 = vld [vmem:[%s3 + $0xe8] sm:$0xff]
      %v510 = vld [vmem:[%s3 + $0xf0] sm:$0xff]
      %v511 = vld [vmem:[%s3 + $0xf8] sm:$0xff]
      %v512 = vld [vmem:[%s3 + $0x100] sm:$0xff]
      %v513 = vld [vmem:[%s3 + $0x108] sm:$0xff]
      %v514 = vld [vmem:[%s3 + $0x110] sm:$0xff]
      %v515 = vld [vmem:[%s3 + $0x118] sm:$0xff]
      %v516 = vld [vmem:[%s3 + $0x120] sm:$0xff]
      %v517 = vld [vmem:[%s3 + $0x128] sm:$0xff]
      %v518 = vld [vmem:[%s3 + $0x130] sm:$0xff]
      %v519 = vld [vmem:[%s3 + $0x138] sm:$0xff]
      %v520 = vld [vmem:[%s3 + $0x140] sm:$0xff]
      %v521 = vld [vmem:[%s3 + $0x148] sm:$0xff]
      %v522 = vld [vmem:[%s3 + $0x150] sm:$0xff]
      %v523 = vld [vmem:[%s3 + $0x158] sm:$0xff]
      %v524 = vld [vmem:[%s3 + $0x160] sm:$0xff]
      %v525 = vld [vmem:[%s3 + $0x168] sm:$0xff]
      %v526 = vld [vmem:[%s3 + $0x170] sm:$0xff]
      %v527 = vld [vmem:[%s3 + $0x178] sm:$0xff]
      %v528 = vld [vmem:[%s3 + $0x180] sm:$0xff]
      %v529 = vld [vmem:[%s3 + $0x188] sm:$0xff]
      %v530 = vld [vmem:[%s3 + $0x190] sm:$0xff]
      %v531 = vld [vmem:[%s3 + $0x198] sm:$0xff]
      %v532 = vld [vmem:[%s3 + $0x1a0] sm:$0xff]
      %v533 = vld [vmem:[%s3 + $0x1a8] sm:$0xff]
      %v534 = vld [vmem:[%s3 + $0x1b0] sm:$0xff]
      %v535 = vld [vmem:[%s3 + $0x1b8] sm:$0xff]
      %v536 = vld [vmem:[%s3 + $0x1c0] sm:$0xff]
      %v537 = vld [vmem:[%s3 + $0x1c8] sm:$0xff]
      %v538 = vld [vmem:[%s3 + $0x1d0] sm:$0xff]
      %v539 = vld [vmem:[%s3 + $0x1d8] sm:$0xff]
      %v540 = vld [vmem:[%s3 + $0x1e0] sm:$0xff]
      %v541 = vld [vmem:[%s3 + $0x1e8] sm:$0xff]
      %v542 = vld [vmem:[%s3 + $0x1f0] sm:$0xff]
      %v543 = vld [vmem:[%s3 + $0x1f8] sm:$0xff]
      %v544 = vld [vmem:[%s3 + $0x200] sm:$0xff]
      %v545 = vld [vmem:[%s3 + $0x208] sm:$0xff]
      %v546 = vld [vmem:[%s3 + $0x210] sm:$0xff]
      %v547 = vld [vmem:[%s3 + $0x218] sm:$0xff]
      %v548 = vld [vmem:[%s3 + $0x220] sm:$0xff]
      %v549 = vld [vmem:[%s3 + $0x228] sm:$0xff]
      %v550 = vld [vmem:[%s3 + $0x230] sm:$0xff]
      %v551 = vld [vmem:[%s3 + $0x238] sm:$0xff]
      %v552 = vld [vmem:[%s3 + $0x240] sm:$0xff]
      %v553 = vld [vmem:[%s3 + $0x248] sm:$0xff]
      %v554 = vld [vmem:[%s3 + $0x250] sm:$0xff]
      %v555 = vld [vmem:[%s3 + $0x258] sm:$0xff]
      %v556 = vld [vmem:[%s3 + $0x260] sm:$0xff]
      %v557 = vld [vmem:[%s3 + $0x268] sm:$0xff]
      %v558 = vld [vmem:[%s3 + $0x270] sm:$0xff]
      %v559 = vld [vmem:[%s3 + $0x278] sm:$0xff]
      %v560 = vld [vmem:[%s3 + $0x280] sm:$0xff]
      %v561 = vld [vmem:[%s3 + $0x288] sm:$0xff]
      %v562 = vld [vmem:[%s3 + $0x290] sm:$0xff]
      %v563 = vld [vmem:[%s3 + $0x298] sm:$0xff]
      %v564 = vld [vmem:[%s3 + $0x2a0] sm:$0xff]
      %v565 = vld [vmem:[%s3 + $0x2a8] sm:$0xff]
      %v566 = vld [vmem:[%s3 + $0x2b0] sm:$0xff]
      %v567 = vld [vmem:[%s3 + $0x2b8] sm:$0xff]
      %v568 = vld [vmem:[%s3 + $0x2c0] sm:$0xff]
      %v569 = vld [vmem:[%s3 + $0x2c8] sm:$0xff]
      %v570 = vld [vmem:[%s3 + $0x2d0] sm:$0xff]
      %v571 = vld [vmem:[%s3 + $0x2d8] sm:$0xff]
      %v572 = vld [vmem:[%s3 + $0x2e0] sm:$0xff]
      %v573 = vld [vmem:[%s3 + $0x2e8] sm:$0xff]
      %v574 = vld [vmem:[%s3 + $0x2f0] sm:$0xff]
      %v575 = vld [vmem:[%s3 + $0x2f8] sm:$0xff]
      %v576 = vld [vmem:[%s3 + $0x300] sm:$0xff]
      %v577 = vld [vmem:[%s3 + $0x308] sm:$0xff]
      %v578 = vld [vmem:[%s3 + $0x310] sm:$0xff]
      %v579 = vld [vmem:[%s3 + $0x318] sm:$0xff]
      %v580 = vld [vmem:[%s3 + $0x320] sm:$0xff]
      %v581 = vld [vmem:[%s3 + $0x328] sm:$0xff]
      %v582 = vld [vmem:[%s3 + $0x330] sm:$0xff]
      %v583 = vld [vmem:[%s3 + $0x338] sm:$0xff]
      %v584 = vld [vmem:[%s3 + $0x340] sm:$0xff]
      %v585 = vld [vmem:[%s3 + $0x348] sm:$0xff]
      %v586 = vld [vmem:[%s3 + $0x350] sm:$0xff]
      %v587 = vld [vmem:[%s3 + $0x358] sm:$0xff]
      %v588 = vld [vmem:[%s3 + $0x360] sm:$0xff]
      %v589 = vld [vmem:[%s3 + $0x368] sm:$0xff]
      %v590 = vld [vmem:[%s3 + $0x370] sm:$0xff]
      %v591 = vld [vmem:[%s3 + $0x378] sm:$0xff]
      %v592 = vld [vmem:[%s3 + $0x380] sm:$0xff]
      %v593 = vld [vmem:[%s3 + $0x388] sm:$0xff]
      %v594 = vld [vmem:[%s3 + $0x390] sm:$0xff]
      %v595 = vld [vmem:[%s3 + $0x398] sm:$0xff]
      %v596 = vld [vmem:[%s3 + $0x3a0] sm:$0xff]
      %v597 = vld [vmem:[%s3 + $0x3a8] sm:$0xff]
      %v598 = vld [vmem:[%s3 + $0x3b0] sm:$0xff]
      %v599 = vld [vmem:[%s3 + $0x3b8] sm:$0xff]
      %v600 = vld [vmem:[%s3 + $0x3c0] sm:$0xff]
      %v601 = vld [vmem:[%s3 + $0x3c8] sm:$0xff]
      %v602 = vld [vmem:[%s3 + $0x3d0] sm:$0xff]
      %v603 = vld [vmem:[%s3 + $0x3d8] sm:$0xff]
      %v604 = vld [vmem:[%s3 + $0x3e0] sm:$0xff]
      %v605 = vld [vmem:[%s3 + $0x3e8] sm:$0xff]
      %v606 = vld [vmem:[%s3 + $0x3f0] sm:$0xff]
      %v607 = vld [vmem:[%s3 + $0x3f8] sm:$0xff]
      %v608 = vld [vmem:[%s3 + $0x400] sm:$0xff]
      %v609 = vld [vmem:[%s3 + $0x408] sm:$0xff]
      %v610 = vld [vmem:[%s3 + $0x410] sm:$0xff]
      %v611 = vld [vmem:[%s3 + $0x418] sm:$0xff]
      %v612 = vld [vmem:[%s3 + $0x420] sm:$0xff]
      %v613 = vld [vmem:[%s3 + $0x428] sm:$0xff]
      %v614 = vld [vmem:[%s3 + $0x430] sm:$0xff]
      %v615 = vld [vmem:[%s3 + $0x438] sm:$0xff]
      %v616 = vld [vmem:[%s3 + $0x440] sm:$0xff]
      %v617 = vld [vmem:[%s3 + $0x448] sm:$0xff]
      %v618 = vld [vmem:[%s3 + $0x450] sm:$0xff]
      %v619 = vld [vmem:[%s3 + $0x458] sm:$0xff]
      %v620 = vld [vmem:[%s3 + $0x460] sm:$0xff]
      %v621 = vld [vmem:[%s3 + $0x468] sm:$0xff]
      %v622 = vld [vmem:[%s3 + $0x470] sm:$0xff]
      %v623 = vld [vmem:[%s3 + $0x478] sm:$0xff]
      %v624 = vld [vmem:[%s3 + $0x480] sm:$0xff]
      %v625 = vld [vmem:[%s3 + $0x488] sm:$0xff]
      %v626 = vld [vmem:[%s3 + $0x490] sm:$0xff]
      %v627 = vld [vmem:[%s3 + $0x498] sm:$0xff]
      %v628 = vld [vmem:[%s3 + $0x4a0] sm:$0xff]
      %v629 = vld [vmem:[%s3 + $0x4a8] sm:$0xff]
      %v630 = vld [vmem:[%s3 + $0x4b0] sm:$0xff]
      %v631 = vld [vmem:[%s3 + $0x4b8] sm:$0xff]
      %v632 = vld [vmem:[%s3 + $0x4c0] sm:$0xff]
      %v633 = vld [vmem:[%s3 + $0x4c8] sm:$0xff]
      %v634 = vld [vmem:[%s3 + $0x4d0] sm:$0xff]
      %v635 = vld [vmem:[%s3 + $0x4d8] sm:$0xff]
      %v636 = vld [vmem:[%s3 + $0x4e0] sm:$0xff]
      %v637 = vld [vmem:[%s3 + $0x4e8] sm:$0xff]
      %v638 = vld [vmem:[%s3 + $0x4f0] sm:$0xff]
      %v639 = vld [vmem:[%s3 + $0x4f8] sm:$0xff]
      %v640 = vld [vmem:[%s3 + $0x500] sm:$0xff]
      %v641 = vld [vmem:[%s3 + $0x508] sm:$0xff]
      %v642 = vld [vmem:[%s3 + $0x510] sm:$0xff]
      %v643 = vld [vmem:[%s3 + $0x518] sm:$0xff]
      %v644 = vld [vmem:[%s3 + $0x520] sm:$0xff]
      %v645 = vld [vmem:[%s3 + $0x528] sm:$0xff]
      %v646 = vld [vmem:[%s3 + $0x530] sm:$0xff]
      %v647 = vld [vmem:[%s3 + $0x538] sm:$0xff]
      %v648 = vld [vmem:[%s3 + $0x540] sm:$0xff]
      %v649 = vld [vmem:[%s3 + $0x548] sm:$0xff]
      %v650 = vld [vmem:[%s3 + $0x550] sm:$0xff]
      %v651 = vld [vmem:[%s3 + $0x558] sm:$0xff]
      %v652 = vld [vmem:[%s3 + $0x560] sm:$0xff]
      %v653 = vld [vmem:[%s3 + $0x568] sm:$0xff]
      %v654 = vld [vmem:[%s3 + $0x570] sm:$0xff]
      %v655 = vld [vmem:[%s3 + $0x578] sm:$0xff]
      %v656 = vld [vmem:[%s3 + $0x580] sm:$0xff]
      %v657 = vld [vmem:[%s3 + $0x588] sm:$0xff]
      %v658 = vld [vmem:[%s3 + $0x590] sm:$0xff]
      %v659 = vld [vmem:[%s3 + $0x598] sm:$0xff]
      %v660 = vld [vmem:[%s3 + $0x5a0] sm:$0xff]
      %v661 = vld [vmem:[%s3 + $0x5a8] sm:$0xff]
      %v662 = vld [vmem:[%s3 + $0x5b0] sm:$0xff]
      %v663 = vld [vmem:[%s3 + $0x5b8] sm:$0xff]
      %v664 = vld [vmem:[%s3 + $0x5c0] sm:$0xff]
      %v665 = vld [vmem:[%s3 + $0x5c8] sm:$0xff]
      %v666 = vld [vmem:[%s3 + $0x5d0] sm:$0xff]
      %v667 = vld [vmem:[%s3 + $0x5d8] sm:$0xff]
      %v668 = vld [vmem:[%s3 + $0x5e0] sm:$0xff]
      %v669 = vld [vmem:[%s3 + $0x5e8] sm:$0xff]
      %v670 = vld [vmem:[%s3 + $0x5f0] sm:$0xff]
      %v671 = vld [vmem:[%s3 + $0x5f8] sm:$0xff]
      %v672 = vld [vmem:[%s3 + $0x600] sm:$0xff]
      %v673 = vld [vmem:[%s3 + $0x608] sm:$0xff]
      %v674 = vld [vmem:[%s3 + $0x610] sm:$0xff]
      %v675 = vld [vmem:[%s3 + $0x618] sm:$0xff]
      %v676 = vld [vmem:[%s3 + $0x620] sm:$0xff]
      %v677 = vld [vmem:[%s3 + $0x628] sm:$0xff]
      %v678 = vld [vmem:[%s3 + $0x630] sm:$0xff]
      %v679 = vld [vmem:[%s3 + $0x638] sm:$0xff]
      %v680 = vld [vmem:[%s3 + $0x640] sm:$0xff]
      %v681 = vld [vmem:[%s3 + $0x648] sm:$0xff]
      %v682 = vld [vmem:[%s3 + $0x650] sm:$0xff]
      %v683 = vld [vmem:[%s3 + $0x658] sm:$0xff]
      %v684 = vld [vmem:[%s3 + $0x660] sm:$0xff]
      %v685 = vld [vmem:[%s3 + $0x668] sm:$0xff]
      %v686 = vld [vmem:[%s3 + $0x670] sm:$0xff]
      %v687 = vld [vmem:[%s3 + $0x678] sm:$0xff]
      %v688 = vld [vmem:[%s3 + $0x680] sm:$0xff]
      %v689 = vld [vmem:[%s3 + $0x688] sm:$0xff]
      %v690 = vld [vmem:[%s3 + $0x690] sm:$0xff]
      %v691 = vld [vmem:[%s3 + $0x698] sm:$0xff]
      %v692 = vld [vmem:[%s3 + $0x6a0] sm:$0xff]
      %v693 = vld [vmem:[%s3 + $0x6a8] sm:$0xff]
      %v694 = vld [vmem:[%s3 + $0x6b0] sm:$0xff]
      %v695 = vld [vmem:[%s3 + $0x6b8] sm:$0xff]
      %v696 = vld [vmem:[%s3 + $0x6c0] sm:$0xff]
      %v697 = vld [vmem:[%s3 + $0x6c8] sm:$0xff]
      %v698 = vld [vmem:[%s3 + $0x6d0] sm:$0xff]
      %v699 = vld [vmem:[%s3 + $0x6d8] sm:$0xff]
      %v700 = vld [vmem:[%s3 + $0x6e0] sm:$0xff]
      %v701 = vld [vmem:[%s3 + $0x6e8] sm:$0xff]
      %v702 = vld [vmem:[%s3 + $0x6f0] sm:$0xff]
      %v703 = vld [vmem:[%s3 + $0x6f8] sm:$0xff]
      %v704 = vld [vmem:[%s3 + $0x700] sm:$0xff]
      %v705 = vld [vmem:[%s3 + $0x708] sm:$0xff]
      %v706 = vld [vmem:[%s3 + $0x710] sm:$0xff]
      %v707 = vld [vmem:[%s3 + $0x718] sm:$0xff]
      %v708 = vld [vmem:[%s3 + $0x720] sm:$0xff]
      %v709 = vld [vmem:[%s3 + $0x728] sm:$0xff]
      %v710 = vld [vmem:[%s3 + $0x730] sm:$0xff]
      %v711 = vld [vmem:[%s3 + $0x738] sm:$0xff]
      %v712 = vld [vmem:[%s3 + $0x740] sm:$0xff]
      %v713 = vld [vmem:[%s3 + $0x748] sm:$0xff]
      %v714 = vld [vmem:[%s3 + $0x750] sm:$0xff]
      %v715 = vld [vmem:[%s3 + $0x758] sm:$0xff]
      %v716 = vld [vmem:[%s3 + $0x760] sm:$0xff]
      %v717 = vld [vmem:[%s3 + $0x768] sm:$0xff]
      %v718 = vld [vmem:[%s3 + $0x770] sm:$0xff]
      %v719 = vld [vmem:[%s3 + $0x778] sm:$0xff]
      %v720 = vld [vmem:[%s3 + $0x780] sm:$0xff]
      %v721 = vld [vmem:[%s3 + $0x788] sm:$0xff]
      %v722 = vld [vmem:[%s3 + $0x790] sm:$0xff]
      %v723 = vld [vmem:[%s3 + $0x798] sm:$0xff]
      %v724 = vld [vmem:[%s3 + $0x7a0] sm:$0xff]
      %v725 = vld [vmem:[%s3 + $0x7a8] sm:$0xff]
      %v726 = vld [vmem:[%s3 + $0x7b0] sm:$0xff]
      %v727 = vld [vmem:[%s3 + $0x7b8] sm:$0xff]
      %v728 = vld [vmem:[%s3 + $0x7c0] sm:$0xff]
      %v729 = vld [vmem:[%s3 + $0x7c8] sm:$0xff]
      %v730 = vld [vmem:[%s3 + $0x7d0] sm:$0xff]
      %v731 = vld [vmem:[%s3 + $0x7d8] sm:$0xff]
      %v732 = vld [vmem:[%s3 + $0x7e0] sm:$0xff]
      %v733 = vld [vmem:[%s3 + $0x7e8] sm:$0xff]
      %v734 = vld [vmem:[%s3 + $0x7f0] sm:$0xff]
      %v735 = vld [vmem:[%s3 + $0x7f8] sm:$0xff]
      %v736 = vld [vmem:[%s4] sm:$0xf]
      %v738 = vperm.slane %v736, 0
      %v739 = vperm.slane %v736, 1
      %v740 = vperm.slane %v736, 2
      %v741 = vperm.slane %v736, 3
      %v754 = vunpack.c.l.b16 %v472
      %v755 = vunpack.c.h.b16 %v472
      %v756 = vunpack.c.l.b16 %v473
      %v757 = vunpack.c.h.b16 %v473
      %v758 = vunpack.c.l.b16 %v474
      %v759 = vunpack.c.h.b16 %v474
      %v760 = vunpack.c.l.b16 %v475
      %v761 = vunpack.c.h.b16 %v475
      %v762 = vunpack.c.l.b16 %v476
      %v763 = vunpack.c.h.b16 %v476
      %v764 = vunpack.c.l.b16 %v477
      %v765 = vunpack.c.h.b16 %v477
      %v766 = vunpack.c.l.b16 %v478
      %v767 = vunpack.c.h.b16 %v478
      %v768 = vunpack.c.l.b16 %v479
      %v769 = vunpack.c.h.b16 %v479
      %v770 = vpack.c.b16 %v762, %v754
      %v771 = vpack.c.b16 %v763, %v755
      %v772 = vpack.c.b16 %v764, %v756
      %v773 = vpack.c.b16 %v765, %v757
      %v774 = vpack.c.b16 %v766, %v758
      %v775 = vpack.c.b16 %v767, %v759
      %v776 = vpack.c.b16 %v768, %v760
      %v777 = vpack.c.b16 %v769, %v761
      %v1042 = vunpack.c.l.b16 %v480
      %v1043 = vunpack.c.h.b16 %v480
      %v1044 = vunpack.c.l.b16 %v481
      %v1045 = vunpack.c.h.b16 %v481
      %v1046 = vunpack.c.l.b16 %v482
      %v1047 = vunpack.c.h.b16 %v482
      %v1048 = vunpack.c.l.b16 %v483
      %v1049 = vunpack.c.h.b16 %v483
      %v1050 = vunpack.c.l.b16 %v484
      %v1051 = vunpack.c.h.b16 %v484
      %v1052 = vunpack.c.l.b16 %v485
      %v1053 = vunpack.c.h.b16 %v485
      %v1054 = vunpack.c.l.b16 %v486
      %v1055 = vunpack.c.h.b16 %v486
      %v1056 = vunpack.c.l.b16 %v487
      %v1057 = vunpack.c.h.b16 %v487
      %v1058 = vunpack.c.l.b16 %v488
      %v1059 = vunpack.c.h.b16 %v488
      %v1060 = vunpack.c.l.b16 %v489
      %v1061 = vunpack.c.h.b16 %v489
      %v1062 = vunpack.c.l.b16 %v490
      %v1063 = vunpack.c.h.b16 %v490
      %v1064 = vunpack.c.l.b16 %v491
      %v1065 = vunpack.c.h.b16 %v491
      %v1066 = vunpack.c.l.b16 %v492
      %v1067 = vunpack.c.h.b16 %v492
      %v1068 = vunpack.c.l.b16 %v493
      %v1069 = vunpack.c.h.b16 %v493
      %v1070 = vunpack.c.l.b16 %v494
      %v1071 = vunpack.c.h.b16 %v494
      %v1072 = vunpack.c.l.b16 %v495
      %v1073 = vunpack.c.h.b16 %v495
      %v1074 = vunpack.c.l.b16 %v496
      %v1075 = vunpack.c.h.b16 %v496
      %v1076 = vunpack.c.l.b16 %v497
      %v1077 = vunpack.c.h.b16 %v497
      %v1078 = vunpack.c.l.b16 %v498
      %v1079 = vunpack.c.h.b16 %v498
      %v1080 = vunpack.c.l.b16 %v499
      %v1081 = vunpack.c.h.b16 %v499
      %v1082 = vunpack.c.l.b16 %v500
      %v1083 = vunpack.c.h.b16 %v500
      %v1084 = vunpack.c.l.b16 %v501
      %v1085 = vunpack.c.h.b16 %v501
      %v1086 = vunpack.c.l.b16 %v502
      %v1087 = vunpack.c.h.b16 %v502
      %v1088 = vunpack.c.l.b16 %v503
      %v1089 = vunpack.c.h.b16 %v503
      %v1090 = vunpack.c.l.b16 %v504
      %v1091 = vunpack.c.h.b16 %v504
      %v1092 = vunpack.c.l.b16 %v505
      %v1093 = vunpack.c.h.b16 %v505
      %v1094 = vunpack.c.l.b16 %v506
      %v1095 = vunpack.c.h.b16 %v506
      %v1096 = vunpack.c.l.b16 %v507
      %v1097 = vunpack.c.h.b16 %v507
      %v1098 = vunpack.c.l.b16 %v508
      %v1099 = vunpack.c.h.b16 %v508
      %v1100 = vunpack.c.l.b16 %v509
      %v1101 = vunpack.c.h.b16 %v509
      %v1102 = vunpack.c.l.b16 %v510
      %v1103 = vunpack.c.h.b16 %v510
      %v1104 = vunpack.c.l.b16 %v511
      %v1105 = vunpack.c.h.b16 %v511
      %v1106 = vunpack.c.l.b16 %v512
      %v1107 = vunpack.c.h.b16 %v512
      %v1108 = vunpack.c.l.b16 %v513
      %v1109 = vunpack.c.h.b16 %v513
      %v1110 = vunpack.c.l.b16 %v514
      %v1111 = vunpack.c.h.b16 %v514
      %v1112 = vunpack.c.l.b16 %v515
      %v1113 = vunpack.c.h.b16 %v515
      %v1114 = vunpack.c.l.b16 %v516
      %v1115 = vunpack.c.h.b16 %v516
      %v1116 = vunpack.c.l.b16 %v517
      %v1117 = vunpack.c.h.b16 %v517
      %v1118 = vunpack.c.l.b16 %v518
      %v1119 = vunpack.c.h.b16 %v518
      %v1120 = vunpack.c.l.b16 %v519
      %v1121 = vunpack.c.h.b16 %v519
      %v1122 = vunpack.c.l.b16 %v520
      %v1123 = vunpack.c.h.b16 %v520
      %v1124 = vunpack.c.l.b16 %v521
      %v1125 = vunpack.c.h.b16 %v521
      %v1126 = vunpack.c.l.b16 %v522
      %v1127 = vunpack.c.h.b16 %v522
      %v1128 = vunpack.c.l.b16 %v523
      %v1129 = vunpack.c.h.b16 %v523
      %v1130 = vunpack.c.l.b16 %v524
      %v1131 = vunpack.c.h.b16 %v524
      %v1132 = vunpack.c.l.b16 %v525
      %v1133 = vunpack.c.h.b16 %v525
      %v1134 = vunpack.c.l.b16 %v526
      %v1135 = vunpack.c.h.b16 %v526
      %v1136 = vunpack.c.l.b16 %v527
      %v1137 = vunpack.c.h.b16 %v527
      %v1138 = vunpack.c.l.b16 %v528
      %v1139 = vunpack.c.h.b16 %v528
      %v1140 = vunpack.c.l.b16 %v529
      %v1141 = vunpack.c.h.b16 %v529
      %v1142 = vunpack.c.l.b16 %v530
      %v1143 = vunpack.c.h.b16 %v530
      %v1144 = vunpack.c.l.b16 %v531
      %v1145 = vunpack.c.h.b16 %v531
      %v1146 = vunpack.c.l.b16 %v532
      %v1147 = vunpack.c.h.b16 %v532
      %v1148 = vunpack.c.l.b16 %v533
      %v1149 = vunpack.c.h.b16 %v533
      %v1150 = vunpack.c.l.b16 %v534
      %v1151 = vunpack.c.h.b16 %v534
      %v1152 = vunpack.c.l.b16 %v535
      %v1153 = vunpack.c.h.b16 %v535
      %v1154 = vunpack.c.l.b16 %v536
      %v1155 = vunpack.c.h.b16 %v536
      %v1156 = vunpack.c.l.b16 %v537
      %v1157 = vunpack.c.h.b16 %v537
      %v1158 = vunpack.c.l.b16 %v538
      %v1159 = vunpack.c.h.b16 %v538
      %v1160 = vunpack.c.l.b16 %v539
      %v1161 = vunpack.c.h.b16 %v539
      %v1162 = vunpack.c.l.b16 %v540
      %v1163 = vunpack.c.h.b16 %v540
      %v1164 = vunpack.c.l.b16 %v541
      %v1165 = vunpack.c.h.b16 %v541
      %v1166 = vunpack.c.l.b16 %v542
      %v1167 = vunpack.c.h.b16 %v542
      %v1168 = vunpack.c.l.b16 %v543
      %v1169 = vunpack.c.h.b16 %v543
      %v1170 = vunpack.c.l.b16 %v544
      %v1171 = vunpack.c.h.b16 %v544
      %v1172 = vunpack.c.l.b16 %v545
      %v1173 = vunpack.c.h.b16 %v545
      %v1174 = vunpack.c.l.b16 %v546
      %v1175 = vunpack.c.h.b16 %v546
      %v1176 = vunpack.c.l.b16 %v547
      %v1177 = vunpack.c.h.b16 %v547
      %v1178 = vunpack.c.l.b16 %v548
      %v1179 = vunpack.c.h.b16 %v548
      %v1180 = vunpack.c.l.b16 %v549
      %v1181 = vunpack.c.h.b16 %v549
      %v1182 = vunpack.c.l.b16 %v550
      %v1183 = vunpack.c.h.b16 %v550
      %v1184 = vunpack.c.l.b16 %v551
      %v1185 = vunpack.c.h.b16 %v551
      %v1186 = vunpack.c.l.b16 %v552
      %v1187 = vunpack.c.h.b16 %v552
      %v1188 = vunpack.c.l.b16 %v553
      %v1189 = vunpack.c.h.b16 %v553
      %v1190 = vunpack.c.l.b16 %v554
      %v1191 = vunpack.c.h.b16 %v554
      %v1192 = vunpack.c.l.b16 %v555
      %v1193 = vunpack.c.h.b16 %v555
      %v1194 = vunpack.c.l.b16 %v556
      %v1195 = vunpack.c.h.b16 %v556
      %v1196 = vunpack.c.l.b16 %v557
      %v1197 = vunpack.c.h.b16 %v557
      %v1198 = vunpack.c.l.b16 %v558
      %v1199 = vunpack.c.h.b16 %v558
      %v1200 = vunpack.c.l.b16 %v559
      %v1201 = vunpack.c.h.b16 %v559
      %v1202 = vunpack.c.l.b16 %v560
      %v1203 = vunpack.c.h.b16 %v560
      %v1204 = vunpack.c.l.b16 %v561
      %v1205 = vunpack.c.h.b16 %v561
      %v1206 = vunpack.c.l.b16 %v562
      %v1207 = vunpack.c.h.b16 %v562
      %v1208 = vunpack.c.l.b16 %v563
      %v1209 = vunpack.c.h.b16 %v563
      %v1210 = vunpack.c.l.b16 %v564
      %v1211 = vunpack.c.h.b16 %v564
      %v1212 = vunpack.c.l.b16 %v565
      %v1213 = vunpack.c.h.b16 %v565
      %v1214 = vunpack.c.l.b16 %v566
      %v1215 = vunpack.c.h.b16 %v566
      %v1216 = vunpack.c.l.b16 %v567
      %v1217 = vunpack.c.h.b16 %v567
      %v1218 = vunpack.c.l.b16 %v568
      %v1219 = vunpack.c.h.b16 %v568
      %v1220 = vunpack.c.l.b16 %v569
      %v1221 = vunpack.c.h.b16 %v569
      %v1222 = vunpack.c.l.b16 %v570
      %v1223 = vunpack.c.h.b16 %v570
      %v1224 = vunpack.c.l.b16 %v571
      %v1225 = vunpack.c.h.b16 %v571
      %v1226 = vunpack.c.l.b16 %v572
      %v1227 = vunpack.c.h.b16 %v572
      %v1228 = vunpack.c.l.b16 %v573
      %v1229 = vunpack.c.h.b16 %v573
      %v1230 = vunpack.c.l.b16 %v574
      %v1231 = vunpack.c.h.b16 %v574
      %v1232 = vunpack.c.l.b16 %v575
      %v1233 = vunpack.c.h.b16 %v575
      %v1234 = vunpack.c.l.b16 %v576
      %v1235 = vunpack.c.h.b16 %v576
      %v1236 = vunpack.c.l.b16 %v577
      %v1237 = vunpack.c.h.b16 %v577
      %v1238 = vunpack.c.l.b16 %v578
      %v1239 = vunpack.c.h.b16 %v578
      %v1240 = vunpack.c.l.b16 %v579
      %v1241 = vunpack.c.h.b16 %v579
      %v1242 = vunpack.c.l.b16 %v580
      %v1243 = vunpack.c.h.b16 %v580
      %v1244 = vunpack.c.l.b16 %v581
      %v1245 = vunpack.c.h.b16 %v581
      %v1246 = vunpack.c.l.b16 %v582
      %v1247 = vunpack.c.h.b16 %v582
      %v1248 = vunpack.c.l.b16 %v583
      %v1249 = vunpack.c.h.b16 %v583
      %v1250 = vunpack.c.l.b16 %v584
      %v1251 = vunpack.c.h.b16 %v584
      %v1252 = vunpack.c.l.b16 %v585
      %v1253 = vunpack.c.h.b16 %v585
      %v1254 = vunpack.c.l.b16 %v586
      %v1255 = vunpack.c.h.b16 %v586
      %v1256 = vunpack.c.l.b16 %v587
      %v1257 = vunpack.c.h.b16 %v587
      %v1258 = vunpack.c.l.b16 %v588
      %v1259 = vunpack.c.h.b16 %v588
      %v1260 = vunpack.c.l.b16 %v589
      %v1261 = vunpack.c.h.b16 %v589
      %v1262 = vunpack.c.l.b16 %v590
      %v1263 = vunpack.c.h.b16 %v590
      %v1264 = vunpack.c.l.b16 %v591
      %v1265 = vunpack.c.h.b16 %v591
      %v1266 = vunpack.c.l.b16 %v592
      %v1267 = vunpack.c.h.b16 %v592
      %v1268 = vunpack.c.l.b16 %v593
      %v1269 = vunpack.c.h.b16 %v593
      %v1270 = vunpack.c.l.b16 %v594
      %v1271 = vunpack.c.h.b16 %v594
      %v1272 = vunpack.c.l.b16 %v595
      %v1273 = vunpack.c.h.b16 %v595
      %v1274 = vunpack.c.l.b16 %v596
      %v1275 = vunpack.c.h.b16 %v596
      %v1276 = vunpack.c.l.b16 %v597
      %v1277 = vunpack.c.h.b16 %v597
      %v1278 = vunpack.c.l.b16 %v598
      %v1279 = vunpack.c.h.b16 %v598
      %v1280 = vunpack.c.l.b16 %v599
      %v1281 = vunpack.c.h.b16 %v599
      %v1282 = vunpack.c.l.b16 %v600
      %v1283 = vunpack.c.h.b16 %v600
      %v1284 = vunpack.c.l.b16 %v601
      %v1285 = vunpack.c.h.b16 %v601
      %v1286 = vunpack.c.l.b16 %v602
      %v1287 = vunpack.c.h.b16 %v602
      %v1288 = vunpack.c.l.b16 %v603
      %v1289 = vunpack.c.h.b16 %v603
      %v1290 = vunpack.c.l.b16 %v604
      %v1291 = vunpack.c.h.b16 %v604
      %v1292 = vunpack.c.l.b16 %v605
      %v1293 = vunpack.c.h.b16 %v605
      %v1294 = vunpack.c.l.b16 %v606
      %v1295 = vunpack.c.h.b16 %v606
      %v1296 = vunpack.c.l.b16 %v607
      %v1297 = vunpack.c.h.b16 %v607
      %v1298 = vunpack.c.l.b16 %v608
      %v1299 = vunpack.c.h.b16 %v608
      %v1300 = vunpack.c.l.b16 %v609
      %v1301 = vunpack.c.h.b16 %v609
      %v1302 = vunpack.c.l.b16 %v610
      %v1303 = vunpack.c.h.b16 %v610
      %v1304 = vunpack.c.l.b16 %v611
      %v1305 = vunpack.c.h.b16 %v611
      %v1306 = vunpack.c.l.b16 %v612
      %v1307 = vunpack.c.h.b16 %v612
      %v1308 = vunpack.c.l.b16 %v613
      %v1309 = vunpack.c.h.b16 %v613
      %v1310 = vunpack.c.l.b16 %v614
      %v1311 = vunpack.c.h.b16 %v614
      %v1312 = vunpack.c.l.b16 %v615
      %v1313 = vunpack.c.h.b16 %v615
      %v1314 = vunpack.c.l.b16 %v616
      %v1315 = vunpack.c.h.b16 %v616
      %v1316 = vunpack.c.l.b16 %v617
      %v1317 = vunpack.c.h.b16 %v617
      %v1318 = vunpack.c.l.b16 %v618
      %v1319 = vunpack.c.h.b16 %v618
      %v1320 = vunpack.c.l.b16 %v619
      %v1321 = vunpack.c.h.b16 %v619
      %v1322 = vunpack.c.l.b16 %v620
      %v1323 = vunpack.c.h.b16 %v620
      %v1324 = vunpack.c.l.b16 %v621
      %v1325 = vunpack.c.h.b16 %v621
      %v1326 = vunpack.c.l.b16 %v622
      %v1327 = vunpack.c.h.b16 %v622
      %v1328 = vunpack.c.l.b16 %v623
      %v1329 = vunpack.c.h.b16 %v623
      %v1330 = vunpack.c.l.b16 %v624
      %v1331 = vunpack.c.h.b16 %v624
      %v1332 = vunpack.c.l.b16 %v625
      %v1333 = vunpack.c.h.b16 %v625
      %v1334 = vunpack.c.l.b16 %v626
      %v1335 = vunpack.c.h.b16 %v626
      %v1336 = vunpack.c.l.b16 %v627
      %v1337 = vunpack.c.h.b16 %v627
      %v1338 = vunpack.c.l.b16 %v628
      %v1339 = vunpack.c.h.b16 %v628
      %v1340 = vunpack.c.l.b16 %v629
      %v1341 = vunpack.c.h.b16 %v629
      %v1342 = vunpack.c.l.b16 %v630
      %v1343 = vunpack.c.h.b16 %v630
      %v1344 = vunpack.c.l.b16 %v631
      %v1345 = vunpack.c.h.b16 %v631
      %v1346 = vunpack.c.l.b16 %v632
      %v1347 = vunpack.c.h.b16 %v632
      %v1348 = vunpack.c.l.b16 %v633
      %v1349 = vunpack.c.h.b16 %v633
      %v1350 = vunpack.c.l.b16 %v634
      %v1351 = vunpack.c.h.b16 %v634
      %v1352 = vunpack.c.l.b16 %v635
      %v1353 = vunpack.c.h.b16 %v635
      %v1354 = vunpack.c.l.b16 %v636
      %v1355 = vunpack.c.h.b16 %v636
      %v1356 = vunpack.c.l.b16 %v637
      %v1357 = vunpack.c.h.b16 %v637
      %v1358 = vunpack.c.l.b16 %v638
      %v1359 = vunpack.c.h.b16 %v638
      %v1360 = vunpack.c.l.b16 %v639
      %v1361 = vunpack.c.h.b16 %v639
      %v1362 = vunpack.c.l.b16 %v640
      %v1363 = vunpack.c.h.b16 %v640
      %v1364 = vunpack.c.l.b16 %v641
      %v1365 = vunpack.c.h.b16 %v641
      %v1366 = vunpack.c.l.b16 %v642
      %v1367 = vunpack.c.h.b16 %v642
      %v1368 = vunpack.c.l.b16 %v643
      %v1369 = vunpack.c.h.b16 %v643
      %v1370 = vunpack.c.l.b16 %v644
      %v1371 = vunpack.c.h.b16 %v644
      %v1372 = vunpack.c.l.b16 %v645
      %v1373 = vunpack.c.h.b16 %v645
      %v1374 = vunpack.c.l.b16 %v646
      %v1375 = vunpack.c.h.b16 %v646
      %v1376 = vunpack.c.l.b16 %v647
      %v1377 = vunpack.c.h.b16 %v647
      %v1378 = vunpack.c.l.b16 %v648
      %v1379 = vunpack.c.h.b16 %v648
      %v1380 = vunpack.c.l.b16 %v649
      %v1381 = vunpack.c.h.b16 %v649
      %v1382 = vunpack.c.l.b16 %v650
      %v1383 = vunpack.c.h.b16 %v650
      %v1384 = vunpack.c.l.b16 %v651
      %v1385 = vunpack.c.h.b16 %v651
      %v1386 = vunpack.c.l.b16 %v652
      %v1387 = vunpack.c.h.b16 %v652
      %v1388 = vunpack.c.l.b16 %v653
      %v1389 = vunpack.c.h.b16 %v653
      %v1390 = vunpack.c.l.b16 %v654
      %v1391 = vunpack.c.h.b16 %v654
      %v1392 = vunpack.c.l.b16 %v655
      %v1393 = vunpack.c.h.b16 %v655
      %v1394 = vunpack.c.l.b16 %v656
      %v1395 = vunpack.c.h.b16 %v656
      %v1396 = vunpack.c.l.b16 %v657
      %v1397 = vunpack.c.h.b16 %v657
      %v1398 = vunpack.c.l.b16 %v658
      %v1399 = vunpack.c.h.b16 %v658
      %v1400 = vunpack.c.l.b16 %v659
      %v1401 = vunpack.c.h.b16 %v659
      %v1402 = vunpack.c.l.b16 %v660
      %v1403 = vunpack.c.h.b16 %v660
      %v1404 = vunpack.c.l.b16 %v661
      %v1405 = vunpack.c.h.b16 %v661
      %v1406 = vunpack.c.l.b16 %v662
      %v1407 = vunpack.c.h.b16 %v662
      %v1408 = vunpack.c.l.b16 %v663
      %v1409 = vunpack.c.h.b16 %v663
      %v1410 = vunpack.c.l.b16 %v664
      %v1411 = vunpack.c.h.b16 %v664
      %v1412 = vunpack.c.l.b16 %v665
      %v1413 = vunpack.c.h.b16 %v665
      %v1414 = vunpack.c.l.b16 %v666
      %v1415 = vunpack.c.h.b16 %v666
      %v1416 = vunpack.c.l.b16 %v667
      %v1417 = vunpack.c.h.b16 %v667
      %v1418 = vunpack.c.l.b16 %v668
      %v1419 = vunpack.c.h.b16 %v668
      %v1420 = vunpack.c.l.b16 %v669
      %v1421 = vunpack.c.h.b16 %v669
      %v1422 = vunpack.c.l.b16 %v670
      %v1423 = vunpack.c.h.b16 %v670
      %v1424 = vunpack.c.l.b16 %v671
      %v1425 = vunpack.c.h.b16 %v671
      %v1426 = vunpack.c.l.b16 %v672
      %v1427 = vunpack.c.h.b16 %v672
      %v1428 = vunpack.c.l.b16 %v673
      %v1429 = vunpack.c.h.b16 %v673
      %v1430 = vunpack.c.l.b16 %v674
      %v1431 = vunpack.c.h.b16 %v674
      %v1432 = vunpack.c.l.b16 %v675
      %v1433 = vunpack.c.h.b16 %v675
      %v1434 = vunpack.c.l.b16 %v676
      %v1435 = vunpack.c.h.b16 %v676
      %v1436 = vunpack.c.l.b16 %v677
      %v1437 = vunpack.c.h.b16 %v677
      %v1438 = vunpack.c.l.b16 %v678
      %v1439 = vunpack.c.h.b16 %v678
      %v1440 = vunpack.c.l.b16 %v679
      %v1441 = vunpack.c.h.b16 %v679
      %v1442 = vunpack.c.l.b16 %v680
      %v1443 = vunpack.c.h.b16 %v680
      %v1444 = vunpack.c.l.b16 %v681
      %v1445 = vunpack.c.h.b16 %v681
      %v1446 = vunpack.c.l.b16 %v682
      %v1447 = vunpack.c.h.b16 %v682
      %v1448 = vunpack.c.l.b16 %v683
      %v1449 = vunpack.c.h.b16 %v683
      %v1450 = vunpack.c.l.b16 %v684
      %v1451 = vunpack.c.h.b16 %v684
      %v1452 = vunpack.c.l.b16 %v685
      %v1453 = vunpack.c.h.b16 %v685
      %v1454 = vunpack.c.l.b16 %v686
      %v1455 = vunpack.c.h.b16 %v686
      %v1456 = vunpack.c.l.b16 %v687
      %v1457 = vunpack.c.h.b16 %v687
      %v1458 = vunpack.c.l.b16 %v688
      %v1459 = vunpack.c.h.b16 %v688
      %v1460 = vunpack.c.l.b16 %v689
      %v1461 = vunpack.c.h.b16 %v689
      %v1462 = vunpack.c.l.b16 %v690
      %v1463 = vunpack.c.h.b16 %v690
      %v1464 = vunpack.c.l.b16 %v691
      %v1465 = vunpack.c.h.b16 %v691
      %v1466 = vunpack.c.l.b16 %v692
      %v1467 = vunpack.c.h.b16 %v692
      %v1468 = vunpack.c.l.b16 %v693
      %v1469 = vunpack.c.h.b16 %v693
      %v1470 = vunpack.c.l.b16 %v694
      %v1471 = vunpack.c.h.b16 %v694
      %v1472 = vunpack.c.l.b16 %v695
      %v1473 = vunpack.c.h.b16 %v695
      %v1474 = vunpack.c.l.b16 %v696
      %v1475 = vunpack.c.h.b16 %v696
      %v1476 = vunpack.c.l.b16 %v697
      %v1477 = vunpack.c.h.b16 %v697
      %v1478 = vunpack.c.l.b16 %v698
      %v1479 = vunpack.c.h.b16 %v698
      %v1480 = vunpack.c.l.b16 %v699
      %v1481 = vunpack.c.h.b16 %v699
      %v1482 = vunpack.c.l.b16 %v700
      %v1483 = vunpack.c.h.b16 %v700
      %v1484 = vunpack.c.l.b16 %v701
      %v1485 = vunpack.c.h.b16 %v701
      %v1486 = vunpack.c.l.b16 %v702
      %v1487 = vunpack.c.h.b16 %v702
      %v1488 = vunpack.c.l.b16 %v703
      %v1489 = vunpack.c.h.b16 %v703
      %v1490 = vunpack.c.l.b16 %v704
      %v1491 = vunpack.c.h.b16 %v704
      %v1492 = vunpack.c.l.b16 %v705
      %v1493 = vunpack.c.h.b16 %v705
      %v1494 = vunpack.c.l.b16 %v706
      %v1495 = vunpack.c.h.b16 %v706
      %v1496 = vunpack.c.l.b16 %v707
      %v1497 = vunpack.c.h.b16 %v707
      %v1498 = vunpack.c.l.b16 %v708
      %v1499 = vunpack.c.h.b16 %v708
      %v1500 = vunpack.c.l.b16 %v709
      %v1501 = vunpack.c.h.b16 %v709
      %v1502 = vunpack.c.l.b16 %v710
      %v1503 = vunpack.c.h.b16 %v710
      %v1504 = vunpack.c.l.b16 %v711
      %v1505 = vunpack.c.h.b16 %v711
      %v1506 = vunpack.c.l.b16 %v712
      %v1507 = vunpack.c.h.b16 %v712
      %v1508 = vunpack.c.l.b16 %v713
      %v1509 = vunpack.c.h.b16 %v713
      %v1510 = vunpack.c.l.b16 %v714
      %v1511 = vunpack.c.h.b16 %v714
      %v1512 = vunpack.c.l.b16 %v715
      %v1513 = vunpack.c.h.b16 %v715
      %v1514 = vunpack.c.l.b16 %v716
      %v1515 = vunpack.c.h.b16 %v716
      %v1516 = vunpack.c.l.b16 %v717
      %v1517 = vunpack.c.h.b16 %v717
      %v1518 = vunpack.c.l.b16 %v718
      %v1519 = vunpack.c.h.b16 %v718
      %v1520 = vunpack.c.l.b16 %v719
      %v1521 = vunpack.c.h.b16 %v719
      %v1522 = vunpack.c.l.b16 %v720
      %v1523 = vunpack.c.h.b16 %v720
      %v1524 = vunpack.c.l.b16 %v721
      %v1525 = vunpack.c.h.b16 %v721
      %v1526 = vunpack.c.l.b16 %v722
      %v1527 = vunpack.c.h.b16 %v722
      %v1528 = vunpack.c.l.b16 %v723
      %v1529 = vunpack.c.h.b16 %v723
      %v1530 = vunpack.c.l.b16 %v724
      %v1531 = vunpack.c.h.b16 %v724
      %v1532 = vunpack.c.l.b16 %v725
      %v1533 = vunpack.c.h.b16 %v725
      %v1534 = vunpack.c.l.b16 %v726
      %v1535 = vunpack.c.h.b16 %v726
      %v1536 = vunpack.c.l.b16 %v727
      %v1537 = vunpack.c.h.b16 %v727
      %v1538 = vunpack.c.l.b16 %v728
      %v1539 = vunpack.c.h.b16 %v728
      %v1540 = vunpack.c.l.b16 %v729
      %v1541 = vunpack.c.h.b16 %v729
      %v1542 = vunpack.c.l.b16 %v730
      %v1543 = vunpack.c.h.b16 %v730
      %v1544 = vunpack.c.l.b16 %v731
      %v1545 = vunpack.c.h.b16 %v731
      %v1546 = vunpack.c.l.b16 %v732
      %v1547 = vunpack.c.h.b16 %v732
      %v1548 = vunpack.c.l.b16 %v733
      %v1549 = vunpack.c.h.b16 %v733
      %v1550 = vunpack.c.l.b16 %v734
      %v1551 = vunpack.c.h.b16 %v734
      %v1552 = vunpack.c.l.b16 %v735
      %v1553 = vunpack.c.h.b16 %v735
      %v1554 = vpack.c.b16 %v1046, %v1042
      %v1555 = vpack.c.b16 %v1047, %v1043
      %v1556 = vpack.c.b16 %v1048, %v1044
      %v1557 = vpack.c.b16 %v1049, %v1045
      %v1558 = vpack.c.b16 %v1054, %v1050
      %v1559 = vpack.c.b16 %v1055, %v1051
      %v1560 = vpack.c.b16 %v1056, %v1052
      %v1561 = vpack.c.b16 %v1057, %v1053
      %v1562 = vpack.c.b16 %v1062, %v1058
      %v1563 = vpack.c.b16 %v1063, %v1059
      %v1564 = vpack.c.b16 %v1064, %v1060
      %v1565 = vpack.c.b16 %v1065, %v1061
      %v1566 = vpack.c.b16 %v1070, %v1066
      %v1567 = vpack.c.b16 %v1071, %v1067
      %v1568 = vpack.c.b16 %v1072, %v1068
      %v1569 = vpack.c.b16 %v1073, %v1069
      %v1570 = vpack.c.b16 %v1078, %v1074
      %v1571 = vpack.c.b16 %v1079, %v1075
      %v1572 = vpack.c.b16 %v1080, %v1076
      %v1573 = vpack.c.b16 %v1081, %v1077
      %v1574 = vpack.c.b16 %v1086, %v1082
      %v1575 = vpack.c.b16 %v1087, %v1083
      %v1576 = vpack.c.b16 %v1088, %v1084
      %v1577 = vpack.c.b16 %v1089, %v1085
      %v1578 = vpack.c.b16 %v1094, %v1090
      %v1579 = vpack.c.b16 %v1095, %v1091
      %v1580 = vpack.c.b16 %v1096, %v1092
      %v1581 = vpack.c.b16 %v1097, %v1093
      %v1582 = vpack.c.b16 %v1102, %v1098
      %v1583 = vpack.c.b16 %v1103, %v1099
      %v1584 = vpack.c.b16 %v1104, %v1100
      %v1585 = vpack.c.b16 %v1105, %v1101
      %v1586 = vpack.c.b16 %v1110, %v1106
      %v1587 = vpack.c.b16 %v1111, %v1107
      %v1588 = vpack.c.b16 %v1112, %v1108
      %v1589 = vpack.c.b16 %v1113, %v1109
      %v1590 = vpack.c.b16 %v1118, %v1114
      %v1591 = vpack.c.b16 %v1119, %v1115
      %v1592 = vpack.c.b16 %v1120, %v1116
      %v1593 = vpack.c.b16 %v1121, %v1117
      %v1594 = vpack.c.b16 %v1126, %v1122
      %v1595 = vpack.c.b16 %v1127, %v1123
      %v1596 = vpack.c.b16 %v1128, %v1124
      %v1597 = vpack.c.b16 %v1129, %v1125
      %v1598 = vpack.c.b16 %v1134, %v1130
      %v1599 = vpack.c.b16 %v1135, %v1131
      %v1600 = vpack.c.b16 %v1136, %v1132
      %v1601 = vpack.c.b16 %v1137, %v1133
      %v1602 = vpack.c.b16 %v1142, %v1138
      %v1603 = vpack.c.b16 %v1143, %v1139
      %v1604 = vpack.c.b16 %v1144, %v1140
      %v1605 = vpack.c.b16 %v1145, %v1141
      %v1606 = vpack.c.b16 %v1150, %v1146
      %v1607 = vpack.c.b16 %v1151, %v1147
      %v1608 = vpack.c.b16 %v1152, %v1148
      %v1609 = vpack.c.b16 %v1153, %v1149
      %v1610 = vpack.c.b16 %v1158, %v1154
      %v1611 = vpack.c.b16 %v1159, %v1155
      %v1612 = vpack.c.b16 %v1160, %v1156
      %v1613 = vpack.c.b16 %v1161, %v1157
      %v1614 = vpack.c.b16 %v1166, %v1162
      %v1615 = vpack.c.b16 %v1167, %v1163
      %v1616 = vpack.c.b16 %v1168, %v1164
      %v1617 = vpack.c.b16 %v1169, %v1165
      %v1618 = vpack.c.b16 %v1174, %v1170
      %v1619 = vpack.c.b16 %v1175, %v1171
      %v1620 = vpack.c.b16 %v1176, %v1172
      %v1621 = vpack.c.b16 %v1177, %v1173
      %v1622 = vpack.c.b16 %v1182, %v1178
      %v1623 = vpack.c.b16 %v1183, %v1179
      %v1624 = vpack.c.b16 %v1184, %v1180
      %v1625 = vpack.c.b16 %v1185, %v1181
      %v1626 = vpack.c.b16 %v1190, %v1186
      %v1627 = vpack.c.b16 %v1191, %v1187
      %v1628 = vpack.c.b16 %v1192, %v1188
      %v1629 = vpack.c.b16 %v1193, %v1189
      %v1630 = vpack.c.b16 %v1198, %v1194
      %v1631 = vpack.c.b16 %v1199, %v1195
      %v1632 = vpack.c.b16 %v1200, %v1196
      %v1633 = vpack.c.b16 %v1201, %v1197
      %v1634 = vpack.c.b16 %v1206, %v1202
      %v1635 = vpack.c.b16 %v1207, %v1203
      %v1636 = vpack.c.b16 %v1208, %v1204
      %v1637 = vpack.c.b16 %v1209, %v1205
      %v1638 = vpack.c.b16 %v1214, %v1210
      %v1639 = vpack.c.b16 %v1215, %v1211
      %v1640 = vpack.c.b16 %v1216, %v1212
      %v1641 = vpack.c.b16 %v1217, %v1213
      %v1642 = vpack.c.b16 %v1222, %v1218
      %v1643 = vpack.c.b16 %v1223, %v1219
      %v1644 = vpack.c.b16 %v1224, %v1220
      %v1645 = vpack.c.b16 %v1225, %v1221
      %v1646 = vpack.c.b16 %v1230, %v1226
      %v1647 = vpack.c.b16 %v1231, %v1227
      %v1648 = vpack.c.b16 %v1232, %v1228
      %v1649 = vpack.c.b16 %v1233, %v1229
      %v1650 = vpack.c.b16 %v1238, %v1234
      %v1651 = vpack.c.b16 %v1239, %v1235
      %v1652 = vpack.c.b16 %v1240, %v1236
      %v1653 = vpack.c.b16 %v1241, %v1237
      %v1654 = vpack.c.b16 %v1246, %v1242
      %v1655 = vpack.c.b16 %v1247, %v1243
      %v1656 = vpack.c.b16 %v1248, %v1244
      %v1657 = vpack.c.b16 %v1249, %v1245
      %v1658 = vpack.c.b16 %v1254, %v1250
      %v1659 = vpack.c.b16 %v1255, %v1251
      %v1660 = vpack.c.b16 %v1256, %v1252
      %v1661 = vpack.c.b16 %v1257, %v1253
      %v1662 = vpack.c.b16 %v1262, %v1258
      %v1663 = vpack.c.b16 %v1263, %v1259
      %v1664 = vpack.c.b16 %v1264, %v1260
      %v1665 = vpack.c.b16 %v1265, %v1261
      %v1666 = vpack.c.b16 %v1270, %v1266
      %v1667 = vpack.c.b16 %v1271, %v1267
      %v1668 = vpack.c.b16 %v1272, %v1268
      %v1669 = vpack.c.b16 %v1273, %v1269
      %v1670 = vpack.c.b16 %v1278, %v1274
      %v1671 = vpack.c.b16 %v1279, %v1275
      %v1672 = vpack.c.b16 %v1280, %v1276
      %v1673 = vpack.c.b16 %v1281, %v1277
      %v1674 = vpack.c.b16 %v1286, %v1282
      %v1675 = vpack.c.b16 %v1287, %v1283
      %v1676 = vpack.c.b16 %v1288, %v1284
      %v1677 = vpack.c.b16 %v1289, %v1285
      %v1678 = vpack.c.b16 %v1294, %v1290
      %v1679 = vpack.c.b16 %v1295, %v1291
      %v1680 = vpack.c.b16 %v1296, %v1292
      %v1681 = vpack.c.b16 %v1297, %v1293
      %v1682 = vpack.c.b16 %v1302, %v1298
      %v1683 = vpack.c.b16 %v1303, %v1299
      %v1684 = vpack.c.b16 %v1304, %v1300
      %v1685 = vpack.c.b16 %v1305, %v1301
      %v1686 = vpack.c.b16 %v1310, %v1306
      %v1687 = vpack.c.b16 %v1311, %v1307
      %v1688 = vpack.c.b16 %v1312, %v1308
      %v1689 = vpack.c.b16 %v1313, %v1309
      %v1690 = vpack.c.b16 %v1318, %v1314
      %v1691 = vpack.c.b16 %v1319, %v1315
      %v1692 = vpack.c.b16 %v1320, %v1316
      %v1693 = vpack.c.b16 %v1321, %v1317
      %v1694 = vpack.c.b16 %v1326, %v1322
      %v1695 = vpack.c.b16 %v1327, %v1323
      %v1696 = vpack.c.b16 %v1328, %v1324
      %v1697 = vpack.c.b16 %v1329, %v1325
      %v1698 = vpack.c.b16 %v1334, %v1330
      %v1699 = vpack.c.b16 %v1335, %v1331
      %v1700 = vpack.c.b16 %v1336, %v1332
      %v1701 = vpack.c.b16 %v1337, %v1333
      %v1702 = vpack.c.b16 %v1342, %v1338
      %v1703 = vpack.c.b16 %v1343, %v1339
      %v1704 = vpack.c.b16 %v1344, %v1340
      %v1705 = vpack.c.b16 %v1345, %v1341
      %v1706 = vpack.c.b16 %v1350, %v1346
      %v1707 = vpack.c.b16 %v1351, %v1347
      %v1708 = vpack.c.b16 %v1352, %v1348
      %v1709 = vpack.c.b16 %v1353, %v1349
      %v1710 = vpack.c.b16 %v1358, %v1354
      %v1711 = vpack.c.b16 %v1359, %v1355
      %v1712 = vpack.c.b16 %v1360, %v1356
      %v1713 = vpack.c.b16 %v1361, %v1357
      %v1714 = vpack.c.b16 %v1366, %v1362
      %v1715 = vpack.c.b16 %v1367, %v1363
      %v1716 = vpack.c.b16 %v1368, %v1364
      %v1717 = vpack.c.b16 %v1369, %v1365
      %v1718 = vpack.c.b16 %v1374, %v1370
      %v1719 = vpack.c.b16 %v1375, %v1371
      %v1720 = vpack.c.b16 %v1376, %v1372
      %v1721 = vpack.c.b16 %v1377, %v1373
      %v1722 = vpack.c.b16 %v1382, %v1378
      %v1723 = vpack.c.b16 %v1383, %v1379
      %v1724 = vpack.c.b16 %v1384, %v1380
      %v1725 = vpack.c.b16 %v1385, %v1381
      %v1726 = vpack.c.b16 %v1390, %v1386
      %v1727 = vpack.c.b16 %v1391, %v1387
      %v1728 = vpack.c.b16 %v1392, %v1388
      %v1729 = vpack.c.b16 %v1393, %v1389
      %v1730 = vpack.c.b16 %v1398, %v1394
      %v1731 = vpack.c.b16 %v1399, %v1395
      %v1732 = vpack.c.b16 %v1400, %v1396
      %v1733 = vpack.c.b16 %v1401, %v1397
      %v1734 = vpack.c.b16 %v1406, %v1402
      %v1735 = vpack.c.b16 %v1407, %v1403
      %v1736 = vpack.c.b16 %v1408, %v1404
      %v1737 = vpack.c.b16 %v1409, %v1405
      %v1738 = vpack.c.b16 %v1414, %v1410
      %v1739 = vpack.c.b16 %v1415, %v1411
      %v1740 = vpack.c.b16 %v1416, %v1412
      %v1741 = vpack.c.b16 %v1417, %v1413
      %v1742 = vpack.c.b16 %v1422, %v1418
      %v1743 = vpack.c.b16 %v1423, %v1419
      %v1744 = vpack.c.b16 %v1424, %v1420
      %v1745 = vpack.c.b16 %v1425, %v1421
      %v1746 = vpack.c.b16 %v1430, %v1426
      %v1747 = vpack.c.b16 %v1431, %v1427
      %v1748 = vpack.c.b16 %v1432, %v1428
      %v1749 = vpack.c.b16 %v1433, %v1429
      %v1750 = vpack.c.b16 %v1438, %v1434
      %v1751 = vpack.c.b16 %v1439, %v1435
      %v1752 = vpack.c.b16 %v1440, %v1436
      %v1753 = vpack.c.b16 %v1441, %v1437
      %v1754 = vpack.c.b16 %v1446, %v1442
      %v1755 = vpack.c.b16 %v1447, %v1443
      %v1756 = vpack.c.b16 %v1448, %v1444
      %v1757 = vpack.c.b16 %v1449, %v1445
      %v1758 = vpack.c.b16 %v1454, %v1450
      %v1759 = vpack.c.b16 %v1455, %v1451
      %v1760 = vpack.c.b16 %v1456, %v1452
      %v1761 = vpack.c.b16 %v1457, %v1453
      %v1762 = vpack.c.b16 %v1462, %v1458
      %v1763 = vpack.c.b16 %v1463, %v1459
      %v1764 = vpack.c.b16 %v1464, %v1460
      %v1765 = vpack.c.b16 %v1465, %v1461
      %v1766 = vpack.c.b16 %v1470, %v1466
      %v1767 = vpack.c.b16 %v1471, %v1467
      %v1768 = vpack.c.b16 %v1472, %v1468
      %v1769 = vpack.c.b16 %v1473, %v1469
      %v1770 = vpack.c.b16 %v1478, %v1474
      %v1771 = vpack.c.b16 %v1479, %v1475
      %v1772 = vpack.c.b16 %v1480, %v1476
      %v1773 = vpack.c.b16 %v1481, %v1477
      %v1774 = vpack.c.b16 %v1486, %v1482
      %v1775 = vpack.c.b16 %v1487, %v1483
      %v1776 = vpack.c.b16 %v1488, %v1484
      %v1777 = vpack.c.b16 %v1489, %v1485
      %v1778 = vpack.c.b16 %v1494, %v1490
      %v1779 = vpack.c.b16 %v1495, %v1491
      %v1780 = vpack.c.b16 %v1496, %v1492
      %v1781 = vpack.c.b16 %v1497, %v1493
      %v1782 = vpack.c.b16 %v1502, %v1498
      %v1783 = vpack.c.b16 %v1503, %v1499
      %v1784 = vpack.c.b16 %v1504, %v1500
      %v1785 = vpack.c.b16 %v1505, %v1501
      %v1786 = vpack.c.b16 %v1510, %v1506
      %v1787 = vpack.c.b16 %v1511, %v1507
      %v1788 = vpack.c.b16 %v1512, %v1508
      %v1789 = vpack.c.b16 %v1513, %v1509
      %v1790 = vpack.c.b16 %v1518, %v1514
      %v1791 = vpack.c.b16 %v1519, %v1515
      %v1792 = vpack.c.b16 %v1520, %v1516
      %v1793 = vpack.c.b16 %v1521, %v1517
      %v1794 = vpack.c.b16 %v1526, %v1522
      %v1795 = vpack.c.b16 %v1527, %v1523
      %v1796 = vpack.c.b16 %v1528, %v1524
      %v1797 = vpack.c.b16 %v1529, %v1525
      %v1798 = vpack.c.b16 %v1534, %v1530
      %v1799 = vpack.c.b16 %v1535, %v1531
      %v1800 = vpack.c.b16 %v1536, %v1532
      %v1801 = vpack.c.b16 %v1537, %v1533
      %v1802 = vpack.c.b16 %v1542, %v1538
      %v1803 = vpack.c.b16 %v1543, %v1539
      %v1804 = vpack.c.b16 %v1544, %v1540
      %v1805 = vpack.c.b16 %v1545, %v1541
      %v1806 = vpack.c.b16 %v1550, %v1546
      %v1807 = vpack.c.b16 %v1551, %v1547
      %v1808 = vpack.c.b16 %v1552, %v1548
      %v1809 = vpack.c.b16 %v1553, %v1549
      %2066 = vmatpush.bf16.msra.mxu0 %v1582
      %2067 = vmatpush.bf16.msra.mxu0 %v1578
      %2068 = vmatpush.bf16.msra.mxu0 %v1574
      %2069 = vmatpush.bf16.msra.mxu0 %v1570
      %2070 = vmatpush.bf16.msra.mxu0 %v1566
      %2071 = vmatpush.bf16.msra.mxu0 %v1562
      %2072 = vmatpush.bf16.msra.mxu0 %v1558
      %2073 = vmatpush.bf16.msra.mxu0 %v1554
      %2074 = vmatmul.bf16.gmra.mxu0 %v770
      %v2075 = vpop.f32.mrf.mxu0
      %v2076 = vadd.f32 %v738, %v2075
      %v2077 = vpop.f32.mrf.mxu0
      %v2078 = vadd.f32 %v738, %v2077
      %2079 = vdwg.mxu0
      %2080 = vmatpush.bf16.msra.mxu0 %v1614
      %2081 = vmatpush.bf16.msra.mxu0 %v1610
      %2082 = vmatpush.bf16.msra.mxu0 %v1606
      %2083 = vmatpush.bf16.msra.mxu0 %v1602
      %2084 = vmatpush.bf16.msra.mxu0 %v1598
      %2085 = vmatpush.bf16.msra.mxu0 %v1594
      %2086 = vmatpush.bf16.msra.mxu0 %v1590
      %2087 = vmatpush.bf16.msra.mxu0 %v1586
      %2088 = vmatmul.bf16.gmra.mxu0 %v771
      %v2089 = vpop.f32.mrf.mxu0
      %v2090 = vadd.f32 %v2076, %v2089
      %v2091 = vpop.f32.mrf.mxu0
      %v2092 = vadd.f32 %v2078, %v2091
      %2093 = vdwg.mxu0
      %2094 = vmatpush.bf16.msra.mxu0 %v1646
      %2095 = vmatpush.bf16.msra.mxu0 %v1642
      %2096 = vmatpush.bf16.msra.mxu0 %v1638
      %2097 = vmatpush.bf16.msra.mxu0 %v1634
      %2098 = vmatpush.bf16.msra.mxu0 %v1630
      %2099 = vmatpush.bf16.msra.mxu0 %v1626
      %2100 = vmatpush.bf16.msra.mxu0 %v1622
      %2101 = vmatpush.bf16.msra.mxu0 %v1618
      %2102 = vmatmul.bf16.gmra.mxu0 %v772
      %v2103 = vpop.f32.mrf.mxu0
      %v2104 = vadd.f32 %v2090, %v2103
      %v2105 = vpop.f32.mrf.mxu0
      %v2106 = vadd.f32 %v2092, %v2105
      %2107 = vdwg.mxu0
      %2108 = vmatpush.bf16.msra.mxu0 %v1678
      %2109 = vmatpush.bf16.msra.mxu0 %v1674
      %2110 = vmatpush.bf16.msra.mxu0 %v1670
      %2111 = vmatpush.bf16.msra.mxu0 %v1666
      %2112 = vmatpush.bf16.msra.mxu0 %v1662
      %2113 = vmatpush.bf16.msra.mxu0 %v1658
      %2114 = vmatpush.bf16.msra.mxu0 %v1654
      %2115 = vmatpush.bf16.msra.mxu0 %v1650
      %2116 = vmatmul.bf16.gmra.mxu0 %v773
      %v2117 = vpop.f32.mrf.mxu0
      %v2118 = vadd.f32 %v2104, %v2117
      %v2119 = vpop.f32.mrf.mxu0
      %v2120 = vadd.f32 %v2106, %v2119
      %2121 = vdwg.mxu0
      %2122 = vmatpush.bf16.msra.mxu0 %v1710
      %2123 = vmatpush.bf16.msra.mxu0 %v1706
      %2124 = vmatpush.bf16.msra.mxu0 %v1702
      %2125 = vmatpush.bf16.msra.mxu0 %v1698
      %2126 = vmatpush.bf16.msra.mxu0 %v1694
      %2127 = vmatpush.bf16.msra.mxu0 %v1690
      %2128 = vmatpush.bf16.msra.mxu0 %v1686
      %2129 = vmatpush.bf16.msra.mxu0 %v1682
      %2130 = vmatmul.bf16.gmra.mxu0 %v774
      %v2131 = vpop.f32.mrf.mxu0
      %v2132 = vadd.f32 %v2118, %v2131
      %v2133 = vpop.f32.mrf.mxu0
      %v2134 = vadd.f32 %v2120, %v2133
      %2135 = vdwg.mxu0
      %2136 = vmatpush.bf16.msra.mxu0 %v1742
      %2137 = vmatpush.bf16.msra.mxu0 %v1738
      %2138 = vmatpush.bf16.msra.mxu0 %v1734
      %2139 = vmatpush.bf16.msra.mxu0 %v1730
      %2140 = vmatpush.bf16.msra.mxu0 %v1726
      %2141 = vmatpush.bf16.msra.mxu0 %v1722
      %2142 = vmatpush.bf16.msra.mxu0 %v1718
      %2143 = vmatpush.bf16.msra.mxu0 %v1714
      %2144 = vmatmul.bf16.gmra.mxu0 %v775
      %v2145 = vpop.f32.mrf.mxu0
      %v2146 = vadd.f32 %v2132, %v2145
      %v2147 = vpop.f32.mrf.mxu0
      %v2148 = vadd.f32 %v2134, %v2147
      %2149 = vdwg.mxu0
      %2150 = vmatpush.bf16.msra.mxu0 %v1774
      %2151 = vmatpush.bf16.msra.mxu0 %v1770
      %2152 = vmatpush.bf16.msra.mxu0 %v1766
      %2153 = vmatpush.bf16.msra.mxu0 %v1762
      %2154 = vmatpush.bf16.msra.mxu0 %v1758
      %2155 = vmatpush.bf16.msra.mxu0 %v1754
      %2156 = vmatpush.bf16.msra.mxu0 %v1750
      %2157 = vmatpush.bf16.msra.mxu0 %v1746
      %2158 = vmatmul.bf16.gmra.mxu0 %v776
      %v2159 = vpop.f32.mrf.mxu0
      %v2160 = vadd.f32 %v2146, %v2159
      %v2161 = vpop.f32.mrf.mxu0
      %v2162 = vadd.f32 %v2148, %v2161
      %2163 = vdwg.mxu0
      %2164 = vmatpush.bf16.msra.mxu0 %v1806
      %2165 = vmatpush.bf16.msra.mxu0 %v1802
      %2166 = vmatpush.bf16.msra.mxu0 %v1798
      %2167 = vmatpush.bf16.msra.mxu0 %v1794
      %2168 = vmatpush.bf16.msra.mxu0 %v1790
      %2169 = vmatpush.bf16.msra.mxu0 %v1786
      %2170 = vmatpush.bf16.msra.mxu0 %v1782
      %2171 = vmatpush.bf16.msra.mxu0 %v1778
      %2172 = vmatmul.bf16.gmra.mxu0 %v777
      %v2173 = vpop.f32.mrf.mxu0
      %v2174 = vadd.f32 %v2160, %v2173
      %v2175 = vpop.f32.mrf.mxu0
      %v2176 = vadd.f32 %v2162, %v2175
      %2177 = vdwg.mxu0
      %2178 = vmatpush.bf16.msra.mxu0 %v1583
      %2179 = vmatpush.bf16.msra.mxu0 %v1579
      %2180 = vmatpush.bf16.msra.mxu0 %v1575
      %2181 = vmatpush.bf16.msra.mxu0 %v1571
      %2182 = vmatpush.bf16.msra.mxu0 %v1567
      %2183 = vmatpush.bf16.msra.mxu0 %v1563
      %2184 = vmatpush.bf16.msra.mxu0 %v1559
      %2185 = vmatpush.bf16.msra.mxu0 %v1555
      %2186 = vmatmul.bf16.gmra.mxu0 %v770
      %v2187 = vpop.f32.mrf.mxu0
      %v2188 = vadd.f32 %v739, %v2187
      %v2189 = vpop.f32.mrf.mxu0
      %v2190 = vadd.f32 %v739, %v2189
      %2191 = vdwg.mxu0
      %2192 = vmatpush.bf16.msra.mxu0 %v1615
      %2193 = vmatpush.bf16.msra.mxu0 %v1611
      %2194 = vmatpush.bf16.msra.mxu0 %v1607
      %2195 = vmatpush.bf16.msra.mxu0 %v1603
      %2196 = vmatpush.bf16.msra.mxu0 %v1599
      %2197 = vmatpush.bf16.msra.mxu0 %v1595
      %2198 = vmatpush.bf16.msra.mxu0 %v1591
      %2199 = vmatpush.bf16.msra.mxu0 %v1587
      %2200 = vmatmul.bf16.gmra.mxu0 %v771
      %v2201 = vpop.f32.mrf.mxu0
      %v2202 = vadd.f32 %v2188, %v2201
      %v2203 = vpop.f32.mrf.mxu0
      %v2204 = vadd.f32 %v2190, %v2203
      %2205 = vdwg.mxu0
      %2206 = vmatpush.bf16.msra.mxu0 %v1647
      %2207 = vmatpush.bf16.msra.mxu0 %v1643
      %2208 = vmatpush.bf16.msra.mxu0 %v1639
      %2209 = vmatpush.bf16.msra.mxu0 %v1635
      %2210 = vmatpush.bf16.msra.mxu0 %v1631
      %2211 = vmatpush.bf16.msra.mxu0 %v1627
      %2212 = vmatpush.bf16.msra.mxu0 %v1623
      %2213 = vmatpush.bf16.msra.mxu0 %v1619
      %2214 = vmatmul.bf16.gmra.mxu0 %v772
      %v2215 = vpop.f32.mrf.mxu0
      %v2216 = vadd.f32 %v2202, %v2215
      %v2217 = vpop.f32.mrf.mxu0
      %v2218 = vadd.f32 %v2204, %v2217
      %2219 = vdwg.mxu0
      %2220 = vmatpush.bf16.msra.mxu0 %v1679
      %2221 = vmatpush.bf16.msra.mxu0 %v1675
      %2222 = vmatpush.bf16.msra.mxu0 %v1671
      %2223 = vmatpush.bf16.msra.mxu0 %v1667
      %2224 = vmatpush.bf16.msra.mxu0 %v1663
      %2225 = vmatpush.bf16.msra.mxu0 %v1659
      %2226 = vmatpush.bf16.msra.mxu0 %v1655
      %2227 = vmatpush.bf16.msra.mxu0 %v1651
      %2228 = vmatmul.bf16.gmra.mxu0 %v773
      %v2229 = vpop.f32.mrf.mxu0
      %v2230 = vadd.f32 %v2216, %v2229
      %v2231 = vpop.f32.mrf.mxu0
      %v2232 = vadd.f32 %v2218, %v2231
      %2233 = vdwg.mxu0
      %2234 = vmatpush.bf16.msra.mxu0 %v1711
      %2235 = vmatpush.bf16.msra.mxu0 %v1707
      %2236 = vmatpush.bf16.msra.mxu0 %v1703
      %2237 = vmatpush.bf16.msra.mxu0 %v1699
      %2238 = vmatpush.bf16.msra.mxu0 %v1695
      %2239 = vmatpush.bf16.msra.mxu0 %v1691
      %2240 = vmatpush.bf16.msra.mxu0 %v1687
      %2241 = vmatpush.bf16.msra.mxu0 %v1683
      %2242 = vmatmul.bf16.gmra.mxu0 %v774
      %v2243 = vpop.f32.mrf.mxu0
      %v2244 = vadd.f32 %v2230, %v2243
      %v2245 = vpop.f32.mrf.mxu0
      %v2246 = vadd.f32 %v2232, %v2245
      %2247 = vdwg.mxu0
      %2248 = vmatpush.bf16.msra.mxu0 %v1743
      %2249 = vmatpush.bf16.msra.mxu0 %v1739
      %2250 = vmatpush.bf16.msra.mxu0 %v1735
      %2251 = vmatpush.bf16.msra.mxu0 %v1731
      %2252 = vmatpush.bf16.msra.mxu0 %v1727
      %2253 = vmatpush.bf16.msra.mxu0 %v1723
      %2254 = vmatpush.bf16.msra.mxu0 %v1719
      %2255 = vmatpush.bf16.msra.mxu0 %v1715
      %2256 = vmatmul.bf16.gmra.mxu0 %v775
      %v2257 = vpop.f32.mrf.mxu0
      %v2258 = vadd.f32 %v2244, %v2257
      %v2259 = vpop.f32.mrf.mxu0
      %v2260 = vadd.f32 %v2246, %v2259
      %2261 = vdwg.mxu0
      %2262 = vmatpush.bf16.msra.mxu0 %v1775
      %2263 = vmatpush.bf16.msra.mxu0 %v1771
      %2264 = vmatpush.bf16.msra.mxu0 %v1767
      %2265 = vmatpush.bf16.msra.mxu0 %v1763
      %2266 = vmatpush.bf16.msra.mxu0 %v1759
      %2267 = vmatpush.bf16.msra.mxu0 %v1755
      %2268 = vmatpush.bf16.msra.mxu0 %v1751
      %2269 = vmatpush.bf16.msra.mxu0 %v1747
      %2270 = vmatmul.bf16.gmra.mxu0 %v776
      %v2271 = vpop.f32.mrf.mxu0
      %v2272 = vadd.f32 %v2258, %v2271
      %v2273 = vpop.f32.mrf.mxu0
      %v2274 = vadd.f32 %v2260, %v2273
      %2275 = vdwg.mxu0
      %2276 = vmatpush.bf16.msra.mxu0 %v1807
      %2277 = vmatpush.bf16.msra.mxu0 %v1803
      %2278 = vmatpush.bf16.msra.mxu0 %v1799
      %2279 = vmatpush.bf16.msra.mxu0 %v1795
      %2280 = vmatpush.bf16.msra.mxu0 %v1791
      %2281 = vmatpush.bf16.msra.mxu0 %v1787
      %2282 = vmatpush.bf16.msra.mxu0 %v1783
      %2283 = vmatpush.bf16.msra.mxu0 %v1779
      %2284 = vmatmul.bf16.gmra.mxu0 %v777
      %v2285 = vpop.f32.mrf.mxu0
      %v2286 = vadd.f32 %v2272, %v2285
      %v2287 = vpop.f32.mrf.mxu0
      %v2288 = vadd.f32 %v2274, %v2287
      %2289 = vdwg.mxu0
      %2290 = vmatpush.bf16.msra.mxu0 %v1584
      %2291 = vmatpush.bf16.msra.mxu0 %v1580
      %2292 = vmatpush.bf16.msra.mxu0 %v1576
      %2293 = vmatpush.bf16.msra.mxu0 %v1572
      %2294 = vmatpush.bf16.msra.mxu0 %v1568
      %2295 = vmatpush.bf16.msra.mxu0 %v1564
      %2296 = vmatpush.bf16.msra.mxu0 %v1560
      %2297 = vmatpush.bf16.msra.mxu0 %v1556
      %2298 = vmatmul.bf16.gmra.mxu0 %v770
      %v2299 = vpop.f32.mrf.mxu0
      %v2300 = vadd.f32 %v740, %v2299
      %v2301 = vpop.f32.mrf.mxu0
      %v2302 = vadd.f32 %v740, %v2301
      %2303 = vdwg.mxu0
      %2304 = vmatpush.bf16.msra.mxu0 %v1616
      %2305 = vmatpush.bf16.msra.mxu0 %v1612
      %2306 = vmatpush.bf16.msra.mxu0 %v1608
      %2307 = vmatpush.bf16.msra.mxu0 %v1604
      %2308 = vmatpush.bf16.msra.mxu0 %v1600
      %2309 = vmatpush.bf16.msra.mxu0 %v1596
      %2310 = vmatpush.bf16.msra.mxu0 %v1592
      %2311 = vmatpush.bf16.msra.mxu0 %v1588
      %2312 = vmatmul.bf16.gmra.mxu0 %v771
      %v2313 = vpop.f32.mrf.mxu0
      %v2314 = vadd.f32 %v2300, %v2313
      %v2315 = vpop.f32.mrf.mxu0
      %v2316 = vadd.f32 %v2302, %v2315
      %2317 = vdwg.mxu0
      %2318 = vmatpush.bf16.msra.mxu0 %v1648
      %2319 = vmatpush.bf16.msra.mxu0 %v1644
      %2320 = vmatpush.bf16.msra.mxu0 %v1640
      %2321 = vmatpush.bf16.msra.mxu0 %v1636
      %2322 = vmatpush.bf16.msra.mxu0 %v1632
      %2323 = vmatpush.bf16.msra.mxu0 %v1628
      %2324 = vmatpush.bf16.msra.mxu0 %v1624
      %2325 = vmatpush.bf16.msra.mxu0 %v1620
      %2326 = vmatmul.bf16.gmra.mxu0 %v772
      %v2327 = vpop.f32.mrf.mxu0
      %v2328 = vadd.f32 %v2314, %v2327
      %v2329 = vpop.f32.mrf.mxu0
      %v2330 = vadd.f32 %v2316, %v2329
      %2331 = vdwg.mxu0
      %2332 = vmatpush.bf16.msra.mxu0 %v1680
      %2333 = vmatpush.bf16.msra.mxu0 %v1676
      %2334 = vmatpush.bf16.msra.mxu0 %v1672
      %2335 = vmatpush.bf16.msra.mxu0 %v1668
      %2336 = vmatpush.bf16.msra.mxu0 %v1664
      %2337 = vmatpush.bf16.msra.mxu0 %v1660
      %2338 = vmatpush.bf16.msra.mxu0 %v1656
      %2339 = vmatpush.bf16.msra.mxu0 %v1652
      %2340 = vmatmul.bf16.gmra.mxu0 %v773
      %v2341 = vpop.f32.mrf.mxu0
      %v2342 = vadd.f32 %v2328, %v2341
      %v2343 = vpop.f32.mrf.mxu0
      %v2344 = vadd.f32 %v2330, %v2343
      %2345 = vdwg.mxu0
      %2346 = vmatpush.bf16.msra.mxu0 %v1712
      %2347 = vmatpush.bf16.msra.mxu0 %v1708
      %2348 = vmatpush.bf16.msra.mxu0 %v1704
      %2349 = vmatpush.bf16.msra.mxu0 %v1700
      %2350 = vmatpush.bf16.msra.mxu0 %v1696
      %2351 = vmatpush.bf16.msra.mxu0 %v1692
      %2352 = vmatpush.bf16.msra.mxu0 %v1688
      %2353 = vmatpush.bf16.msra.mxu0 %v1684
      %2354 = vmatmul.bf16.gmra.mxu0 %v774
      %v2355 = vpop.f32.mrf.mxu0
      %v2356 = vadd.f32 %v2342, %v2355
      %v2357 = vpop.f32.mrf.mxu0
      %v2358 = vadd.f32 %v2344, %v2357
      %2359 = vdwg.mxu0
      %2360 = vmatpush.bf16.msra.mxu0 %v1744
      %2361 = vmatpush.bf16.msra.mxu0 %v1740
      %2362 = vmatpush.bf16.msra.mxu0 %v1736
      %2363 = vmatpush.bf16.msra.mxu0 %v1732
      %2364 = vmatpush.bf16.msra.mxu0 %v1728
      %2365 = vmatpush.bf16.msra.mxu0 %v1724
      %2366 = vmatpush.bf16.msra.mxu0 %v1720
      %2367 = vmatpush.bf16.msra.mxu0 %v1716
      %2368 = vmatmul.bf16.gmra.mxu0 %v775
      %v2369 = vpop.f32.mrf.mxu0
      %v2370 = vadd.f32 %v2356, %v2369
      %v2371 = vpop.f32.mrf.mxu0
      %v2372 = vadd.f32 %v2358, %v2371
      %2373 = vdwg.mxu0
      %2374 = vmatpush.bf16.msra.mxu0 %v1776
      %2375 = vmatpush.bf16.msra.mxu0 %v1772
      %2376 = vmatpush.bf16.msra.mxu0 %v1768
      %2377 = vmatpush.bf16.msra.mxu0 %v1764
      %2378 = vmatpush.bf16.msra.mxu0 %v1760
      %2379 = vmatpush.bf16.msra.mxu0 %v1756
      %2380 = vmatpush.bf16.msra.mxu0 %v1752
      %2381 = vmatpush.bf16.msra.mxu0 %v1748
      %2382 = vmatmul.bf16.gmra.mxu0 %v776
      %v2383 = vpop.f32.mrf.mxu0
      %v2384 = vadd.f32 %v2370, %v2383
      %v2385 = vpop.f32.mrf.mxu0
      %v2386 = vadd.f32 %v2372, %v2385
      %2387 = vdwg.mxu0
      %2388 = vmatpush.bf16.msra.mxu0 %v1808
      %2389 = vmatpush.bf16.msra.mxu0 %v1804
      %2390 = vmatpush.bf16.msra.mxu0 %v1800
      %2391 = vmatpush.bf16.msra.mxu0 %v1796
      %2392 = vmatpush.bf16.msra.mxu0 %v1792
      %2393 = vmatpush.bf16.msra.mxu0 %v1788
      %2394 = vmatpush.bf16.msra.mxu0 %v1784
      %2395 = vmatpush.bf16.msra.mxu0 %v1780
      %2396 = vmatmul.bf16.gmra.mxu0 %v777
      %v2397 = vpop.f32.mrf.mxu0
      %v2398 = vadd.f32 %v2384, %v2397
      %v2399 = vpop.f32.mrf.mxu0
      %v2400 = vadd.f32 %v2386, %v2399
      %2401 = vdwg.mxu0
      %2402 = vmatpush.bf16.msra.mxu0 %v1585
      %2403 = vmatpush.bf16.msra.mxu0 %v1581
      %2404 = vmatpush.bf16.msra.mxu0 %v1577
      %2405 = vmatpush.bf16.msra.mxu0 %v1573
      %2406 = vmatpush.bf16.msra.mxu0 %v1569
      %2407 = vmatpush.bf16.msra.mxu0 %v1565
      %2408 = vmatpush.bf16.msra.mxu0 %v1561
      %2409 = vmatpush.bf16.msra.mxu0 %v1557
      %2410 = vmatmul.bf16.gmra.mxu0 %v770
      %v2411 = vpop.f32.mrf.mxu0
      %v2412 = vadd.f32 %v741, %v2411
      %v2413 = vpop.f32.mrf.mxu0
      %v2414 = vadd.f32 %v741, %v2413
      %2415 = vdwg.mxu0
      %2416 = vmatpush.bf16.msra.mxu0 %v1617
      %2417 = vmatpush.bf16.msra.mxu0 %v1613
      %2418 = vmatpush.bf16.msra.mxu0 %v1609
      %2419 = vmatpush.bf16.msra.mxu0 %v1605
      %2420 = vmatpush.bf16.msra.mxu0 %v1601
      %2421 = vmatpush.bf16.msra.mxu0 %v1597
      %2422 = vmatpush.bf16.msra.mxu0 %v1593
      %2423 = vmatpush.bf16.msra.mxu0 %v1589
      %2424 = vmatmul.bf16.gmra.mxu0 %v771
      %v2425 = vpop.f32.mrf.mxu0
      %v2426 = vadd.f32 %v2412, %v2425
      %v2427 = vpop.f32.mrf.mxu0
      %v2428 = vadd.f32 %v2414, %v2427
      %2429 = vdwg.mxu0
      %2430 = vmatpush.bf16.msra.mxu0 %v1649
      %2431 = vmatpush.bf16.msra.mxu0 %v1645
      %2432 = vmatpush.bf16.msra.mxu0 %v1641
      %2433 = vmatpush.bf16.msra.mxu0 %v1637
      %2434 = vmatpush.bf16.msra.mxu0 %v1633
      %2435 = vmatpush.bf16.msra.mxu0 %v1629
      %2436 = vmatpush.bf16.msra.mxu0 %v1625
      %2437 = vmatpush.bf16.msra.mxu0 %v1621
      %2438 = vmatmul.bf16.gmra.mxu0 %v772
      %v2439 = vpop.f32.mrf.mxu0
      %v2440 = vadd.f32 %v2426, %v2439
      %v2441 = vpop.f32.mrf.mxu0
      %v2442 = vadd.f32 %v2428, %v2441
      %2443 = vdwg.mxu0
      %2444 = vmatpush.bf16.msra.mxu0 %v1681
      %2445 = vmatpush.bf16.msra.mxu0 %v1677
      %2446 = vmatpush.bf16.msra.mxu0 %v1673
      %2447 = vmatpush.bf16.msra.mxu0 %v1669
      %2448 = vmatpush.bf16.msra.mxu0 %v1665
      %2449 = vmatpush.bf16.msra.mxu0 %v1661
      %2450 = vmatpush.bf16.msra.mxu0 %v1657
      %2451 = vmatpush.bf16.msra.mxu0 %v1653
      %2452 = vmatmul.bf16.gmra.mxu0 %v773
      %v2453 = vpop.f32.mrf.mxu0
      %v2454 = vadd.f32 %v2440, %v2453
      %v2455 = vpop.f32.mrf.mxu0
      %v2456 = vadd.f32 %v2442, %v2455
      %2457 = vdwg.mxu0
      %2458 = vmatpush.bf16.msra.mxu0 %v1713
      %2459 = vmatpush.bf16.msra.mxu0 %v1709
      %2460 = vmatpush.bf16.msra.mxu0 %v1705
      %2461 = vmatpush.bf16.msra.mxu0 %v1701
      %2462 = vmatpush.bf16.msra.mxu0 %v1697
      %2463 = vmatpush.bf16.msra.mxu0 %v1693
      %2464 = vmatpush.bf16.msra.mxu0 %v1689
      %2465 = vmatpush.bf16.msra.mxu0 %v1685
      %2466 = vmatmul.bf16.gmra.mxu0 %v774
      %v2467 = vpop.f32.mrf.mxu0
      %v2468 = vadd.f32 %v2454, %v2467
      %v2469 = vpop.f32.mrf.mxu0
      %v2470 = vadd.f32 %v2456, %v2469
      %2471 = vdwg.mxu0
      %2472 = vmatpush.bf16.msra.mxu0 %v1745
      %2473 = vmatpush.bf16.msra.mxu0 %v1741
      %2474 = vmatpush.bf16.msra.mxu0 %v1737
      %2475 = vmatpush.bf16.msra.mxu0 %v1733
      %2476 = vmatpush.bf16.msra.mxu0 %v1729
      %2477 = vmatpush.bf16.msra.mxu0 %v1725
      %2478 = vmatpush.bf16.msra.mxu0 %v1721
      %2479 = vmatpush.bf16.msra.mxu0 %v1717
      %2480 = vmatmul.bf16.gmra.mxu0 %v775
      %v2481 = vpop.f32.mrf.mxu0
      %v2482 = vadd.f32 %v2468, %v2481
      %v2483 = vpop.f32.mrf.mxu0
      %v2484 = vadd.f32 %v2470, %v2483
      %2485 = vdwg.mxu0
      %2486 = vmatpush.bf16.msra.mxu0 %v1777
      %2487 = vmatpush.bf16.msra.mxu0 %v1773
      %2488 = vmatpush.bf16.msra.mxu0 %v1769
      %2489 = vmatpush.bf16.msra.mxu0 %v1765
      %2490 = vmatpush.bf16.msra.mxu0 %v1761
      %2491 = vmatpush.bf16.msra.mxu0 %v1757
      %2492 = vmatpush.bf16.msra.mxu0 %v1753
      %2493 = vmatpush.bf16.msra.mxu0 %v1749
      %2494 = vmatmul.bf16.gmra.mxu0 %v776
      %v2495 = vpop.f32.mrf.mxu0
      %v2496 = vadd.f32 %v2482, %v2495
      %v2497 = vpop.f32.mrf.mxu0
      %v2498 = vadd.f32 %v2484, %v2497
      %2499 = vdwg.mxu0
      %2500 = vmatpush.bf16.msra.mxu0 %v1809
      %2501 = vmatpush.bf16.msra.mxu0 %v1805
      %2502 = vmatpush.bf16.msra.mxu0 %v1801
      %2503 = vmatpush.bf16.msra.mxu0 %v1797
      %2504 = vmatpush.bf16.msra.mxu0 %v1793
      %2505 = vmatpush.bf16.msra.mxu0 %v1789
      %2506 = vmatpush.bf16.msra.mxu0 %v1785
      %2507 = vmatpush.bf16.msra.mxu0 %v1781
      %2508 = vmatmul.bf16.gmra.mxu0 %v777
      %v2509 = vpop.f32.mrf.mxu0
      %v2510 = vadd.f32 %v2496, %v2509
      %v2511 = vpop.f32.mrf.mxu0
      %v2512 = vadd.f32 %v2498, %v2511
      %2513 = vdwg.mxu0
      %v2514 = vmax.f32 %v2174, 0.0
      %v2515 = vmax.f32 %v2286, 0.0
      %v2516 = vmax.f32 %v2398, 0.0
      %v2517 = vmax.f32 %v2510, 0.0
      %v2518 = vmax.f32 %v2176, 0.0
      %v2519 = vmax.f32 %v2288, 0.0
      %v2520 = vmax.f32 %v2400, 0.0
      %v2521 = vmax.f32 %v2512, 0.0
      %v2522 = vpack.c.bf16 %v2518, %v2514
      %v2523 = vpack.c.bf16 %v2519, %v2515
      %v2524 = vpack.c.bf16 %v2520, %v2516
      %v2525 = vpack.c.bf16 %v2521, %v2517
      %v2526 = vld [vmem:[%s5] sm:$0xff]
      %v2527 = vld [vmem:[%s5 + $0x8] sm:$0xff]
      %v2528 = vld [vmem:[%s5 + $0x10] sm:$0xff]
      %v2529 = vld [vmem:[%s5 + $0x18] sm:$0xff]
      %v2530 = vld [vmem:[%s5 + $0x20] sm:$0xff]
      %v2531 = vld [vmem:[%s5 + $0x28] sm:$0xff]
      %v2532 = vld [vmem:[%s5 + $0x30] sm:$0xff]
      %v2533 = vld [vmem:[%s5 + $0x38] sm:$0xff]
      %v2534 = vld [vmem:[%s5 + $0x40] sm:$0xff]
      %v2535 = vld [vmem:[%s5 + $0x48] sm:$0xff]
      %v2536 = vld [vmem:[%s5 + $0x50] sm:$0xff]
      %v2537 = vld [vmem:[%s5 + $0x58] sm:$0xff]
      %v2538 = vld [vmem:[%s5 + $0x60] sm:$0xff]
      %v2539 = vld [vmem:[%s5 + $0x68] sm:$0xff]
      %v2540 = vld [vmem:[%s5 + $0x70] sm:$0xff]
      %v2541 = vld [vmem:[%s5 + $0x78] sm:$0xff]
      %v2542 = vld [vmem:[%s5 + $0x80] sm:$0xff]
      %v2543 = vld [vmem:[%s5 + $0x88] sm:$0xff]
      %v2544 = vld [vmem:[%s5 + $0x90] sm:$0xff]
      %v2545 = vld [vmem:[%s5 + $0x98] sm:$0xff]
      %v2546 = vld [vmem:[%s5 + $0xa0] sm:$0xff]
      %v2547 = vld [vmem:[%s5 + $0xa8] sm:$0xff]
      %v2548 = vld [vmem:[%s5 + $0xb0] sm:$0xff]
      %v2549 = vld [vmem:[%s5 + $0xb8] sm:$0xff]
      %v2550 = vld [vmem:[%s5 + $0xc0] sm:$0xff]
      %v2551 = vld [vmem:[%s5 + $0xc8] sm:$0xff]
      %v2552 = vld [vmem:[%s5 + $0xd0] sm:$0xff]
      %v2553 = vld [vmem:[%s5 + $0xd8] sm:$0xff]
      %v2554 = vld [vmem:[%s5 + $0xe0] sm:$0xff]
      %v2555 = vld [vmem:[%s5 + $0xe8] sm:$0xff]
      %v2556 = vld [vmem:[%s5 + $0xf0] sm:$0xff]
      %v2557 = vld [vmem:[%s5 + $0xf8] sm:$0xff]
      %v2558 = vld [vmem:[%s5 + $0x100] sm:$0xff]
      %v2559 = vld [vmem:[%s5 + $0x108] sm:$0xff]
      %v2560 = vld [vmem:[%s5 + $0x110] sm:$0xff]
      %v2561 = vld [vmem:[%s5 + $0x118] sm:$0xff]
      %v2562 = vld [vmem:[%s5 + $0x120] sm:$0xff]
      %v2563 = vld [vmem:[%s5 + $0x128] sm:$0xff]
      %v2564 = vld [vmem:[%s5 + $0x130] sm:$0xff]
      %v2565 = vld [vmem:[%s5 + $0x138] sm:$0xff]
      %v2566 = vld [vmem:[%s5 + $0x140] sm:$0xff]
      %v2567 = vld [vmem:[%s5 + $0x148] sm:$0xff]
      %v2568 = vld [vmem:[%s5 + $0x150] sm:$0xff]
      %v2569 = vld [vmem:[%s5 + $0x158] sm:$0xff]
      %v2570 = vld [vmem:[%s5 + $0x160] sm:$0xff]
      %v2571 = vld [vmem:[%s5 + $0x168] sm:$0xff]
      %v2572 = vld [vmem:[%s5 + $0x170] sm:$0xff]
      %v2573 = vld [vmem:[%s5 + $0x178] sm:$0xff]
      %v2574 = vld [vmem:[%s5 + $0x180] sm:$0xff]
      %v2575 = vld [vmem:[%s5 + $0x188] sm:$0xff]
      %v2576 = vld [vmem:[%s5 + $0x190] sm:$0xff]
      %v2577 = vld [vmem:[%s5 + $0x198] sm:$0xff]
      %v2578 = vld [vmem:[%s5 + $0x1a0] sm:$0xff]
      %v2579 = vld [vmem:[%s5 + $0x1a8] sm:$0xff]
      %v2580 = vld [vmem:[%s5 + $0x1b0] sm:$0xff]
      %v2581 = vld [vmem:[%s5 + $0x1b8] sm:$0xff]
      %v2582 = vld [vmem:[%s5 + $0x1c0] sm:$0xff]
      %v2583 = vld [vmem:[%s5 + $0x1c8] sm:$0xff]
      %v2584 = vld [vmem:[%s5 + $0x1d0] sm:$0xff]
      %v2585 = vld [vmem:[%s5 + $0x1d8] sm:$0xff]
      %v2586 = vld [vmem:[%s5 + $0x1e0] sm:$0xff]
      %v2587 = vld [vmem:[%s5 + $0x1e8] sm:$0xff]
      %v2588 = vld [vmem:[%s5 + $0x1f0] sm:$0xff]
      %v2589 = vld [vmem:[%s5 + $0x1f8] sm:$0xff]
      %v2590 = vld [vmem:[%s6] sm:$0x3]
      %v2592 = vperm.slane %v2590, 0
      %v2593 = vperm.slane %v2590, 1
      %v2660 = vunpack.c.l.b16 %v2526
      %v2661 = vunpack.c.h.b16 %v2526
      %v2662 = vunpack.c.l.b16 %v2527
      %v2663 = vunpack.c.h.b16 %v2527
      %v2664 = vunpack.c.l.b16 %v2528
      %v2665 = vunpack.c.h.b16 %v2528
      %v2666 = vunpack.c.l.b16 %v2529
      %v2667 = vunpack.c.h.b16 %v2529
      %v2668 = vunpack.c.l.b16 %v2530
      %v2669 = vunpack.c.h.b16 %v2530
      %v2670 = vunpack.c.l.b16 %v2531
      %v2671 = vunpack.c.h.b16 %v2531
      %v2672 = vunpack.c.l.b16 %v2532
      %v2673 = vunpack.c.h.b16 %v2532
      %v2674 = vunpack.c.l.b16 %v2533
      %v2675 = vunpack.c.h.b16 %v2533
      %v2676 = vunpack.c.l.b16 %v2534
      %v2677 = vunpack.c.h.b16 %v2534
      %v2678 = vunpack.c.l.b16 %v2535
      %v2679 = vunpack.c.h.b16 %v2535
      %v2680 = vunpack.c.l.b16 %v2536
      %v2681 = vunpack.c.h.b16 %v2536
      %v2682 = vunpack.c.l.b16 %v2537
      %v2683 = vunpack.c.h.b16 %v2537
      %v2684 = vunpack.c.l.b16 %v2538
      %v2685 = vunpack.c.h.b16 %v2538
      %v2686 = vunpack.c.l.b16 %v2539
      %v2687 = vunpack.c.h.b16 %v2539
      %v2688 = vunpack.c.l.b16 %v2540
      %v2689 = vunpack.c.h.b16 %v2540
      %v2690 = vunpack.c.l.b16 %v2541
      %v2691 = vunpack.c.h.b16 %v2541
      %v2692 = vunpack.c.l.b16 %v2542
      %v2693 = vunpack.c.h.b16 %v2542
      %v2694 = vunpack.c.l.b16 %v2543
      %v2695 = vunpack.c.h.b16 %v2543
      %v2696 = vunpack.c.l.b16 %v2544
      %v2697 = vunpack.c.h.b16 %v2544
      %v2698 = vunpack.c.l.b16 %v2545
      %v2699 = vunpack.c.h.b16 %v2545
      %v2700 = vunpack.c.l.b16 %v2546
      %v2701 = vunpack.c.h.b16 %v2546
      %v2702 = vunpack.c.l.b16 %v2547
      %v2703 = vunpack.c.h.b16 %v2547
      %v2704 = vunpack.c.l.b16 %v2548
      %v2705 = vunpack.c.h.b16 %v2548
      %v2706 = vunpack.c.l.b16 %v2549
      %v2707 = vunpack.c.h.b16 %v2549
      %v2708 = vunpack.c.l.b16 %v2550
      %v2709 = vunpack.c.h.b16 %v2550
      %v2710 = vunpack.c.l.b16 %v2551
      %v2711 = vunpack.c.h.b16 %v2551
      %v2712 = vunpack.c.l.b16 %v2552
      %v2713 = vunpack.c.h.b16 %v2552
      %v2714 = vunpack.c.l.b16 %v2553
      %v2715 = vunpack.c.h.b16 %v2553
      %v2716 = vunpack.c.l.b16 %v2554
      %v2717 = vunpack.c.h.b16 %v2554
      %v2718 = vunpack.c.l.b16 %v2555
      %v2719 = vunpack.c.h.b16 %v2555
      %v2720 = vunpack.c.l.b16 %v2556
      %v2721 = vunpack.c.h.b16 %v2556
      %v2722 = vunpack.c.l.b16 %v2557
      %v2723 = vunpack.c.h.b16 %v2557
      %v2724 = vunpack.c.l.b16 %v2558
      %v2725 = vunpack.c.h.b16 %v2558
      %v2726 = vunpack.c.l.b16 %v2559
      %v2727 = vunpack.c.h.b16 %v2559
      %v2728 = vunpack.c.l.b16 %v2560
      %v2729 = vunpack.c.h.b16 %v2560
      %v2730 = vunpack.c.l.b16 %v2561
      %v2731 = vunpack.c.h.b16 %v2561
      %v2732 = vunpack.c.l.b16 %v2562
      %v2733 = vunpack.c.h.b16 %v2562
      %v2734 = vunpack.c.l.b16 %v2563
      %v2735 = vunpack.c.h.b16 %v2563
      %v2736 = vunpack.c.l.b16 %v2564
      %v2737 = vunpack.c.h.b16 %v2564
      %v2738 = vunpack.c.l.b16 %v2565
      %v2739 = vunpack.c.h.b16 %v2565
      %v2740 = vunpack.c.l.b16 %v2566
      %v2741 = vunpack.c.h.b16 %v2566
      %v2742 = vunpack.c.l.b16 %v2567
      %v2743 = vunpack.c.h.b16 %v2567
      %v2744 = vunpack.c.l.b16 %v2568
      %v2745 = vunpack.c.h.b16 %v2568
      %v2746 = vunpack.c.l.b16 %v2569
      %v2747 = vunpack.c.h.b16 %v2569
      %v2748 = vunpack.c.l.b16 %v2570
      %v2749 = vunpack.c.h.b16 %v2570
      %v2750 = vunpack.c.l.b16 %v2571
      %v2751 = vunpack.c.h.b16 %v2571
      %v2752 = vunpack.c.l.b16 %v2572
      %v2753 = vunpack.c.h.b16 %v2572
      %v2754 = vunpack.c.l.b16 %v2573
      %v2755 = vunpack.c.h.b16 %v2573
      %v2756 = vunpack.c.l.b16 %v2574
      %v2757 = vunpack.c.h.b16 %v2574
      %v2758 = vunpack.c.l.b16 %v2575
      %v2759 = vunpack.c.h.b16 %v2575
      %v2760 = vunpack.c.l.b16 %v2576
      %v2761 = vunpack.c.h.b16 %v2576
      %v2762 = vunpack.c.l.b16 %v2577
      %v2763 = vunpack.c.h.b16 %v2577
      %v2764 = vunpack.c.l.b16 %v2578
      %v2765 = vunpack.c.h.b16 %v2578
      %v2766 = vunpack.c.l.b16 %v2579
      %v2767 = vunpack.c.h.b16 %v2579
      %v2768 = vunpack.c.l.b16 %v2580
      %v2769 = vunpack.c.h.b16 %v2580
      %v2770 = vunpack.c.l.b16 %v2581
      %v2771 = vunpack.c.h.b16 %v2581
      %v2772 = vunpack.c.l.b16 %v2582
      %v2773 = vunpack.c.h.b16 %v2582
      %v2774 = vunpack.c.l.b16 %v2583
      %v2775 = vunpack.c.h.b16 %v2583
      %v2776 = vunpack.c.l.b16 %v2584
      %v2777 = vunpack.c.h.b16 %v2584
      %v2778 = vunpack.c.l.b16 %v2585
      %v2779 = vunpack.c.h.b16 %v2585
      %v2780 = vunpack.c.l.b16 %v2586
      %v2781 = vunpack.c.h.b16 %v2586
      %v2782 = vunpack.c.l.b16 %v2587
      %v2783 = vunpack.c.h.b16 %v2587
      %v2784 = vunpack.c.l.b16 %v2588
      %v2785 = vunpack.c.h.b16 %v2588
      %v2786 = vunpack.c.l.b16 %v2589
      %v2787 = vunpack.c.h.b16 %v2589
      %v2788 = vpack.c.b16 %v2662, %v2660
      %v2789 = vpack.c.b16 %v2663, %v2661
      %v2790 = vpack.c.b16 %v2666, %v2664
      %v2791 = vpack.c.b16 %v2667, %v2665
      %v2792 = vpack.c.b16 %v2670, %v2668
      %v2793 = vpack.c.b16 %v2671, %v2669
      %v2794 = vpack.c.b16 %v2674, %v2672
      %v2795 = vpack.c.b16 %v2675, %v2673
      %v2796 = vpack.c.b16 %v2678, %v2676
      %v2797 = vpack.c.b16 %v2679, %v2677
      %v2798 = vpack.c.b16 %v2682, %v2680
      %v2799 = vpack.c.b16 %v2683, %v2681
      %v2800 = vpack.c.b16 %v2686, %v2684
      %v2801 = vpack.c.b16 %v2687, %v2685
      %v2802 = vpack.c.b16 %v2690, %v2688
      %v2803 = vpack.c.b16 %v2691, %v2689
      %v2804 = vpack.c.b16 %v2694, %v2692
      %v2805 = vpack.c.b16 %v2695, %v2693
      %v2806 = vpack.c.b16 %v2698, %v2696
      %v2807 = vpack.c.b16 %v2699, %v2697
      %v2808 = vpack.c.b16 %v2702, %v2700
      %v2809 = vpack.c.b16 %v2703, %v2701
      %v2810 = vpack.c.b16 %v2706, %v2704
      %v2811 = vpack.c.b16 %v2707, %v2705
      %v2812 = vpack.c.b16 %v2710, %v2708
      %v2813 = vpack.c.b16 %v2711, %v2709
      %v2814 = vpack.c.b16 %v2714, %v2712
      %v2815 = vpack.c.b16 %v2715, %v2713
      %v2816 = vpack.c.b16 %v2718, %v2716
      %v2817 = vpack.c.b16 %v2719, %v2717
      %v2818 = vpack.c.b16 %v2722, %v2720
      %v2819 = vpack.c.b16 %v2723, %v2721
      %v2820 = vpack.c.b16 %v2726, %v2724
      %v2821 = vpack.c.b16 %v2727, %v2725
      %v2822 = vpack.c.b16 %v2730, %v2728
      %v2823 = vpack.c.b16 %v2731, %v2729
      %v2824 = vpack.c.b16 %v2734, %v2732
      %v2825 = vpack.c.b16 %v2735, %v2733
      %v2826 = vpack.c.b16 %v2738, %v2736
      %v2827 = vpack.c.b16 %v2739, %v2737
      %v2828 = vpack.c.b16 %v2742, %v2740
      %v2829 = vpack.c.b16 %v2743, %v2741
      %v2830 = vpack.c.b16 %v2746, %v2744
      %v2831 = vpack.c.b16 %v2747, %v2745
      %v2832 = vpack.c.b16 %v2750, %v2748
      %v2833 = vpack.c.b16 %v2751, %v2749
      %v2834 = vpack.c.b16 %v2754, %v2752
      %v2835 = vpack.c.b16 %v2755, %v2753
      %v2836 = vpack.c.b16 %v2758, %v2756
      %v2837 = vpack.c.b16 %v2759, %v2757
      %v2838 = vpack.c.b16 %v2762, %v2760
      %v2839 = vpack.c.b16 %v2763, %v2761
      %v2840 = vpack.c.b16 %v2766, %v2764
      %v2841 = vpack.c.b16 %v2767, %v2765
      %v2842 = vpack.c.b16 %v2770, %v2768
      %v2843 = vpack.c.b16 %v2771, %v2769
      %v2844 = vpack.c.b16 %v2774, %v2772
      %v2845 = vpack.c.b16 %v2775, %v2773
      %v2846 = vpack.c.b16 %v2778, %v2776
      %v2847 = vpack.c.b16 %v2779, %v2777
      %v2848 = vpack.c.b16 %v2782, %v2780
      %v2849 = vpack.c.b16 %v2783, %v2781
      %v2850 = vpack.c.b16 %v2786, %v2784
      %v2851 = vpack.c.b16 %v2787, %v2785
      %2916 = vmatpush.bf16.msra.mxu0 %v2802
      %2917 = vmatpush.bf16.msra.mxu0 %v2800
      %2918 = vmatpush.bf16.msra.mxu0 %v2798
      %2919 = vmatpush.bf16.msra.mxu0 %v2796
      %2920 = vmatpush.bf16.msra.mxu0 %v2794
      %2921 = vmatpush.bf16.msra.mxu0 %v2792
      %2922 = vmatpush.bf16.msra.mxu0 %v2790
      %2923 = vmatpush.bf16.msra.mxu0 %v2788
      %2924 = vmatmul.bf16.gmra.mxu0 %v2522
      %v2925 = vpop.f32.mrf.mxu0
      %v2926 = vadd.f32 %v2592, %v2925
      %v2927 = vpop.f32.mrf.mxu0
      %v2928 = vadd.f32 %v2592, %v2927
      %2929 = vdwg.mxu0
      %2930 = vmatpush.bf16.msra.mxu0 %v2818
      %2931 = vmatpush.bf16.msra.mxu0 %v2816
      %2932 = vmatpush.bf16.msra.mxu0 %v2814
      %2933 = vmatpush.bf16.msra.mxu0 %v2812
      %2934 = vmatpush.bf16.msra.mxu0 %v2810
      %2935 = vmatpush.bf16.msra.mxu0 %v2808
      %2936 = vmatpush.bf16.msra.mxu0 %v2806
      %2937 = vmatpush.bf16.msra.mxu0 %v2804
      %2938 = vmatmul.bf16.gmra.mxu0 %v2523
      %v2939 = vpop.f32.mrf.mxu0
      %v2940 = vadd.f32 %v2926, %v2939
      %v2941 = vpop.f32.mrf.mxu0
      %v2942 = vadd.f32 %v2928, %v2941
      %2943 = vdwg.mxu0
      %2944 = vmatpush.bf16.msra.mxu0 %v2834
      %2945 = vmatpush.bf16.msra.mxu0 %v2832
      %2946 = vmatpush.bf16.msra.mxu0 %v2830
      %2947 = vmatpush.bf16.msra.mxu0 %v2828
      %2948 = vmatpush.bf16.msra.mxu0 %v2826
      %2949 = vmatpush.bf16.msra.mxu0 %v2824
      %2950 = vmatpush.bf16.msra.mxu0 %v2822
      %2951 = vmatpush.bf16.msra.mxu0 %v2820
      %2952 = vmatmul.bf16.gmra.mxu0 %v2524
      %v2953 = vpop.f32.mrf.mxu0
      %v2954 = vadd.f32 %v2940, %v2953
      %v2955 = vpop.f32.mrf.mxu0
      %v2956 = vadd.f32 %v2942, %v2955
      %2957 = vdwg.mxu0
      %2958 = vmatpush.bf16.msra.mxu0 %v2850
      %2959 = vmatpush.bf16.msra.mxu0 %v2848
      %2960 = vmatpush.bf16.msra.mxu0 %v2846
      %2961 = vmatpush.bf16.msra.mxu0 %v2844
      %2962 = vmatpush.bf16.msra.mxu0 %v2842
      %2963 = vmatpush.bf16.msra.mxu0 %v2840
      %2964 = vmatpush.bf16.msra.mxu0 %v2838
      %2965 = vmatpush.bf16.msra.mxu0 %v2836
      %2966 = vmatmul.bf16.gmra.mxu0 %v2525
      %v2967 = vpop.f32.mrf.mxu0
      %v2968 = vadd.f32 %v2954, %v2967
      %v2969 = vpop.f32.mrf.mxu0
      %v2970 = vadd.f32 %v2956, %v2969
      %2971 = vdwg.mxu0
      %2972 = vmatpush.bf16.msra.mxu0 %v2803
      %2973 = vmatpush.bf16.msra.mxu0 %v2801
      %2974 = vmatpush.bf16.msra.mxu0 %v2799
      %2975 = vmatpush.bf16.msra.mxu0 %v2797
      %2976 = vmatpush.bf16.msra.mxu0 %v2795
      %2977 = vmatpush.bf16.msra.mxu0 %v2793
      %2978 = vmatpush.bf16.msra.mxu0 %v2791
      %2979 = vmatpush.bf16.msra.mxu0 %v2789
      %2980 = vmatmul.bf16.gmra.mxu0 %v2522
      %v2981 = vpop.f32.mrf.mxu0
      %v2982 = vadd.f32 %v2593, %v2981
      %v2983 = vpop.f32.mrf.mxu0
      %v2984 = vadd.f32 %v2593, %v2983
      %2985 = vdwg.mxu0
      %2986 = vmatpush.bf16.msra.mxu0 %v2819
      %2987 = vmatpush.bf16.msra.mxu0 %v2817
      %2988 = vmatpush.bf16.msra.mxu0 %v2815
      %2989 = vmatpush.bf16.msra.mxu0 %v2813
      %2990 = vmatpush.bf16.msra.mxu0 %v2811
      %2991 = vmatpush.bf16.msra.mxu0 %v2809
      %2992 = vmatpush.bf16.msra.mxu0 %v2807
      %2993 = vmatpush.bf16.msra.mxu0 %v2805
      %2994 = vmatmul.bf16.gmra.mxu0 %v2523
      %v2995 = vpop.f32.mrf.mxu0
      %v2996 = vadd.f32 %v2982, %v2995
      %v2997 = vpop.f32.mrf.mxu0
      %v2998 = vadd.f32 %v2984, %v2997
      %2999 = vdwg.mxu0
      %3000 = vmatpush.bf16.msra.mxu0 %v2835
      %3001 = vmatpush.bf16.msra.mxu0 %v2833
      %3002 = vmatpush.bf16.msra.mxu0 %v2831
      %3003 = vmatpush.bf16.msra.mxu0 %v2829
      %3004 = vmatpush.bf16.msra.mxu0 %v2827
      %3005 = vmatpush.bf16.msra.mxu0 %v2825
      %3006 = vmatpush.bf16.msra.mxu0 %v2823
      %3007 = vmatpush.bf16.msra.mxu0 %v2821
      %3008 = vmatmul.bf16.gmra.mxu0 %v2524
      %v3009 = vpop.f32.mrf.mxu0
      %v3010 = vadd.f32 %v2996, %v3009
      %v3011 = vpop.f32.mrf.mxu0
      %v3012 = vadd.f32 %v2998, %v3011
      %3013 = vdwg.mxu0
      %3014 = vmatpush.bf16.msra.mxu0 %v2851
      %3015 = vmatpush.bf16.msra.mxu0 %v2849
      %3016 = vmatpush.bf16.msra.mxu0 %v2847
      %3017 = vmatpush.bf16.msra.mxu0 %v2845
      %3018 = vmatpush.bf16.msra.mxu0 %v2843
      %3019 = vmatpush.bf16.msra.mxu0 %v2841
      %3020 = vmatpush.bf16.msra.mxu0 %v2839
      %3021 = vmatpush.bf16.msra.mxu0 %v2837
      %3022 = vmatmul.bf16.gmra.mxu0 %v2525
      %v3023 = vpop.f32.mrf.mxu0
      %v3024 = vadd.f32 %v3010, %v3023
      %v3025 = vpop.f32.mrf.mxu0
      %v3026 = vadd.f32 %v3012, %v3025
      %3027 = vdwg.mxu0
      %v3028 = vmax.f32 %v2968, 0.0
      %v3029 = vmax.f32 %v3024, 0.0
      %v3030 = vmax.f32 %v2970, 0.0
      %v3031 = vmax.f32 %v3026, 0.0
      %v3032 = vpack.c.bf16 %v3030, %v3028
      %v3033 = vpack.c.bf16 %v3031, %v3029
      %v3034 = vld [vmem:[%s7] sm:$0xf]
      %v3035 = vld [vmem:[%s7 + $0x4] sm:$0xf]
      %v3036 = vld [vmem:[%s7 + $0x8] sm:$0xf]
      %v3037 = vld [vmem:[%s7 + $0xc] sm:$0xf]
      %v3038 = vld [vmem:[%s7 + $0x10] sm:$0xf]
      %v3039 = vld [vmem:[%s7 + $0x14] sm:$0xf]
      %v3040 = vld [vmem:[%s7 + $0x18] sm:$0xf]
      %v3041 = vld [vmem:[%s7 + $0x1c] sm:$0xf]
      %v3042 = vld [vmem:[%s7 + $0x20] sm:$0xf]
      %v3043 = vld [vmem:[%s7 + $0x24] sm:$0xf]
      %v3044 = vld [vmem:[%s7 + $0x28] sm:$0xf]
      %v3045 = vld [vmem:[%s7 + $0x2c] sm:$0xf]
      %v3046 = vld [vmem:[%s7 + $0x30] sm:$0xf]
      %v3047 = vld [vmem:[%s7 + $0x34] sm:$0xf]
      %v3048 = vld [vmem:[%s7 + $0x38] sm:$0xf]
      %v3049 = vld [vmem:[%s7 + $0x3c] sm:$0xf]
      %v3050 = vld [vmem:[%s7 + $0x40] sm:$0xf]
      %v3051 = vld [vmem:[%s7 + $0x44] sm:$0xf]
      %v3052 = vld [vmem:[%s7 + $0x48] sm:$0xf]
      %v3053 = vld [vmem:[%s7 + $0x4c] sm:$0xf]
      %v3054 = vld [vmem:[%s7 + $0x50] sm:$0xf]
      %v3055 = vld [vmem:[%s7 + $0x54] sm:$0xf]
      %v3056 = vld [vmem:[%s7 + $0x58] sm:$0xf]
      %v3057 = vld [vmem:[%s7 + $0x5c] sm:$0xf]
      %v3058 = vld [vmem:[%s7 + $0x60] sm:$0xf]
      %v3059 = vld [vmem:[%s7 + $0x64] sm:$0xf]
      %v3060 = vld [vmem:[%s7 + $0x68] sm:$0xf]
      %v3061 = vld [vmem:[%s7 + $0x6c] sm:$0xf]
      %v3062 = vld [vmem:[%s7 + $0x70] sm:$0xf]
      %v3063 = vld [vmem:[%s7 + $0x74] sm:$0xf]
      %v3064 = vld [vmem:[%s7 + $0x78] sm:$0xf]
      %v3065 = vld [vmem:[%s7 + $0x7c] sm:$0xf]
      %v3066 = vld [vmem:[%s8] sm:$0x1]
      %v3068 = vperm.slane %v3066, 0
      %v3102 = vunpack.c.l.b16 %v3034
      %v3103 = vunpack.c.l.b16 %v3035
      %v3104 = vunpack.c.l.b16 %v3036
      %v3105 = vunpack.c.l.b16 %v3037
      %v3106 = vunpack.c.l.b16 %v3038
      %v3107 = vunpack.c.l.b16 %v3039
      %v3108 = vunpack.c.l.b16 %v3040
      %v3109 = vunpack.c.l.b16 %v3041
      %v3110 = vunpack.c.l.b16 %v3042
      %v3111 = vunpack.c.l.b16 %v3043
      %v3112 = vunpack.c.l.b16 %v3044
      %v3113 = vunpack.c.l.b16 %v3045
      %v3114 = vunpack.c.l.b16 %v3046
      %v3115 = vunpack.c.l.b16 %v3047
      %v3116 = vunpack.c.l.b16 %v3048
      %v3117 = vunpack.c.l.b16 %v3049
      %v3118 = vunpack.c.l.b16 %v3050
      %v3119 = vunpack.c.l.b16 %v3051
      %v3120 = vunpack.c.l.b16 %v3052
      %v3121 = vunpack.c.l.b16 %v3053
      %v3122 = vunpack.c.l.b16 %v3054
      %v3123 = vunpack.c.l.b16 %v3055
      %v3124 = vunpack.c.l.b16 %v3056
      %v3125 = vunpack.c.l.b16 %v3057
      %v3126 = vunpack.c.l.b16 %v3058
      %v3127 = vunpack.c.l.b16 %v3059
      %v3128 = vunpack.c.l.b16 %v3060
      %v3129 = vunpack.c.l.b16 %v3061
      %v3130 = vunpack.c.l.b16 %v3062
      %v3131 = vunpack.c.l.b16 %v3063
      %v3132 = vunpack.c.l.b16 %v3064
      %v3133 = vunpack.c.l.b16 %v3065
      %v3134 = vpack.c.b16 %v3103, %v3102
      %v3135 = vpack.c.b16 %v3105, %v3104
      %v3136 = vpack.c.b16 %v3107, %v3106
      %v3137 = vpack.c.b16 %v3109, %v3108
      %v3138 = vpack.c.b16 %v3111, %v3110
      %v3139 = vpack.c.b16 %v3113, %v3112
      %v3140 = vpack.c.b16 %v3115, %v3114
      %v3141 = vpack.c.b16 %v3117, %v3116
      %v3142 = vpack.c.b16 %v3119, %v3118
      %v3143 = vpack.c.b16 %v3121, %v3120
      %v3144 = vpack.c.b16 %v3123, %v3122
      %v3145 = vpack.c.b16 %v3125, %v3124
      %v3146 = vpack.c.b16 %v3127, %v3126
      %v3147 = vpack.c.b16 %v3129, %v3128
      %v3148 = vpack.c.b16 %v3131, %v3130
      %v3149 = vpack.c.b16 %v3133, %v3132
      %3166 = vmatpush.bf16.msra.mxu0 %v3141
      %3167 = vmatpush.bf16.msra.mxu0 %v3140
      %3168 = vmatpush.bf16.msra.mxu0 %v3139
      %3169 = vmatpush.bf16.msra.mxu0 %v3138
      %3170 = vmatpush.bf16.msra.mxu0 %v3137
      %3171 = vmatpush.bf16.msra.mxu0 %v3136
      %3172 = vmatpush.bf16.msra.mxu0 %v3135
      %3173 = vmatpush.bf16.msra.mxu0 %v3134
      %3174 = vmatmul.bf16.gmra.mxu0 %v3032
      %v3175 = vpop.f32.mrf.mxu0
      %v3176 = vadd.f32 %v3068, %v3175
      %v3177 = vpop.f32.mrf.mxu0
      %v3178 = vadd.f32 %v3068, %v3177
      %3179 = vdwg.mxu0
      %3180 = vmatpush.bf16.msra.mxu0 %v3149
      %3181 = vmatpush.bf16.msra.mxu0 %v3148
      %3182 = vmatpush.bf16.msra.mxu0 %v3147
      %3183 = vmatpush.bf16.msra.mxu0 %v3146
      %3184 = vmatpush.bf16.msra.mxu0 %v3145
      %3185 = vmatpush.bf16.msra.mxu0 %v3144
      %3186 = vmatpush.bf16.msra.mxu0 %v3143
      %3187 = vmatpush.bf16.msra.mxu0 %v3142
      %3188 = vmatmul.bf16.gmra.mxu0 %v3033
      %v3189 = vpop.f32.mrf.mxu0
      %v3190 = vadd.f32 %v3176, %v3189
      %v3191 = vpop.f32.mrf.mxu0
      %v3192 = vadd.f32 %v3178, %v3191
      %3193 = vdwg.mxu0
      %v3194 = vmax.f32 %v3190, 0.0
      %v3195 = vmax.f32 %v3192, 0.0
      %v3196 = vld [vmem:[%s9] sm:$0x1]
      %v3198 = vperm.slane %v3196, 0
      %v3200 = vmul.f32 %v470, %v3198
      %v3201 = vmul.f32 %v471, %v3198
      %v3202 = vld [vmem:[%s10] sm:$0x1]
      %v3204 = vperm.slane %v3202, 0
      %v3206 = vmul.f32 %v3194, %v3204
      %v3207 = vmul.f32 %v3195, %v3204
      %v3208 = vadd.f32 %v3200, %v3206
      %v3209 = vadd.f32 %v3201, %v3207
      %3210 = vadd.xlane.f32.xlu0 %v3208
      %v3211 = vpop.xlane.xlu0 %3210
      %3212 = vadd.xlane.f32.xlu0 %v3209
      %v3213 = vpop.xlane.xlu0 %3212
      %v3214 = vld [vmem:[#allocation2] sm:$0x1]
      %v3216 = vperm.slane %v3214, 0
      %v3218 = vadd.f32 %v3211, %v3216
      %v3219 = vadd.f32 %v3213, %v3216
      %vm3220 = vcmask 7168
      %3221 = vst.msk [vmem:[%s464] sm:$0xff] %vm3220, %v3218
      %3222 = vst.msk [vmem:[%s464 + $0x8] sm:$0xff] %vm3220, %v3219
      %s3223 = smul.u32 2, %s25
      %p3224 = scmp.lt.s32.totalorder %s3223, 7
      %s3225 = scalar_select %p3224, %s3223, 7
      %s3226 = smul.addr %s3225, 8
      %s3227 = scalar_lea.vmem %s12, %s3226
      // Predicated region
      $region69: #{neumf_forward.1} parent=67 // pred_check
        %p3228 = pneg %p310
      $region70: #{neumf_forward.1} parent=67 // pred_check_branch
        %3230 = sbr.rel (%p3228) target = $region72
      $region71: #{neumf_forward.1} parent=67 // pred_region
        %s3231 = smul.u32 2, %s25
      $region72: #{neumf_forward.1} parent=67 // pred_fallthru
        _
    $region68: #{neumf_forward.1} parent=5 // pred_fallthru
      _
    %p3232 = scmp.le.s32.totalorder 2, %s20
    // Predicated region
    $region73: #{neumf_forward.1} parent=5 // pred_check
      %p3233 = pneg %p3232
    $region74: #{neumf_forward.1} parent=5 // pred_check_branch
      %3235 = sbr.rel (%p3233) target = $region76
    $region75: #{neumf_forward.1} parent=5 // pred_region
      %s3236 = ssub.s32 %s20, 2
      // Predicated region
      $region77: #{neumf_forward.1} parent=75 // pred_check
        %p3237 = pneg %p316
      $region78: #{neumf_forward.1} parent=75 // pred_check_branch
        %3239 = sbr.rel (%p3237) target = $region80
      $region79: #{neumf_forward.1} parent=75 // pred_region
        %s3240 = smul.u32 2, %s26
        %p3241 = scmp.lt.s32.totalorder %s3240, 7
        %s3242 = scalar_select %p3241, %s3240, 7
        %s3243 = smul.addr %s3242, 8
        %s3244 = scalar_lea.vmem %s12, %s3243
      $region80: #{neumf_forward.1} parent=75 // pred_fallthru
        _
    $region76: #{neumf_forward.1} parent=5 // pred_fallthru
      _
  $region6: #{neumf_forward.1} parent=0 // loop_footer
    %s24 = sadd.s32 1, %s20
  $region7: #{neumf_forward.1} parent=0 // loop_footer_branch
    %19 = sbr.rel target = $region3
  $region8: #{neumf_forward.1} parent=0 // loop_exit
    _

</llo_original>
